<compile_context>
chip_gen: v5e
topology: v5e:2x2
jax: 0.10.0
libtpu: 0.0.40
codegen_flags: <defaults>
</compile_context>

<pallas_src>
import math

import jax
import jax.numpy as jnp
import numpy as np
from jax import lax
from jax.experimental import pallas as pl
from jax.experimental.pallas import tpu as pltpu

# ----------------------------- small config -------------------------------
VOCAB = 256
HIDDEN = 128
INTERMEDIATE = 256
NUM_LAYERS = 2
NUM_HEADS = 4
HEAD_DIM = HIDDEN // NUM_HEADS            # 32
HALF = HEAD_DIM // 2                      # 16
ROPE_THETA = 10000.0
EPS = 1e-6                                # nn.LayerNorm(eps=rms_norm_eps)
INIT_STD = 0.02
PAD_ID = 0

BATCH = 2
SEQ = 8
SCALE = 1.0 / math.sqrt(HEAD_DIM)
NEG_INF = -1e30


# ------------------------------ shared math --------------------------------
def _layernorm(v):
    # nn.LayerNorm with default weight=1 / bias=0; rsqrt -> EUP slot.
    mu = jnp.mean(v, axis=-1, keepdims=True)
    var = jnp.mean((v - mu) ** 2, axis=-1, keepdims=True)
    return (v - mu) * lax.rsqrt(var + EPS)


def _shift_lanes(x, k):
    """out[:, d] = x[:, (d + k) % lanes] via static slices + one lane concat
    (unambiguous semantics; wrapped lanes are killed by zero sin entries)."""
    return jnp.concatenate([x[:, k:], x[:, :k]], axis=-1)


def _rope(x, cos, sin_lo, sin_hi):
    """apply_rotary_pos_emb with rotate_half expressed as two lane shifts;
    the sign and the half-of-head selection live in sin_lo / sin_hi."""
    return (x * cos
            + _shift_lanes(x, HALF) * sin_lo
            + _shift_lanes(x, HIDDEN - HALF) * sin_hi)


# --------------------------- fused model kernel ----------------------------
def llama2_kernel(x_ref, rope_q_ref, rope_k_ref, amask_ref, hmask_ref,
                  bsum_ref, wqkv_ref, wo_ref, wgu_ref, wd_ref, out_ref):
    H, I = HIDDEN, INTERMEDIATE
    bf16, f32 = jnp.bfloat16, jnp.float32

    x = x_ref[...]                                  # (T, H) f32 hidden state
    cos_q, sin_lo_q, sin_hi_q = rope_q_ref[0], rope_q_ref[1], rope_q_ref[2]
    cos_k, sin_lo_k, sin_hi_k = rope_k_ref[0], rope_k_ref[1], rope_k_ref[2]
    amask = amask_ref[...]                          # (T, P) additive cross-batch mask
    hmask = hmask_ref[...]                          # (P, H) bf16 0/1 head-block mask
    bsum = bsum_ref[...]                            # (P, P) f32 softmax block-sum matrix

    for layer in range(NUM_LAYERS):                 # tiny model: statically unrolled
        wqkv = wqkv_ref[layer]                      # (H, 3H) bf16
        wo = wo_ref[layer]                          # (H, H)  bf16
        wgu = wgu_ref[layer]                        # (H, 2I) bf16
        wd = wd_ref[layer]                          # (I, H)  bf16

        # ---------------- self-attention ----------------
        h = _layernorm(x).astype(bf16)
        qkv = jnp.dot(h, wqkv, preferred_element_type=f32)            # (T, 3H)
        # 1/sqrt(head_dim) is folded into the q-side RoPE tables.
        q = _rope(qkv[:, 0 * H:1 * H], cos_q, sin_lo_q, sin_hi_q)      # (T, H) f32
        k = _rope(qkv[:, 1 * H:2 * H], cos_k, sin_lo_k, sin_hi_k)      # (T, H) f32
        v = qkv[:, 2 * H:3 * H]                                        # (T, H) f32

        kb = k.astype(bf16)
        vb = v.astype(bf16)
        # Masked head replication: row c of *_pack is token (c % T) restricted
        # to the columns of head (c // T); exact zeros elsewhere.
        k_pack = jnp.concatenate([kb] * NUM_HEADS, axis=0) * hmask     # (P, H)
        v_pack = jnp.concatenate([vb] * NUM_HEADS, axis=0) * hmask     # (P, H)

        s = lax.dot_general(q.astype(bf16), k_pack,
                            (((1,), (1,)), ((), ())),
                            preferred_element_type=f32)                # (T, P)
        s = s + amask                                                  # kill cross-batch
        s = s - jnp.max(s, axis=-1, keepdims=True)                     # safe (max >= block max)
        p = jnp.exp(s)                                                 # masked entries -> 0.0
        denom = jnp.dot(p, bsum, preferred_element_type=f32)           # per-head block sums
        p = p / denom                                                  # exact f32 softmax
        o = jnp.dot(p.astype(bf16), v_pack, preferred_element_type=f32)   # (T, H)
        x = x + jnp.dot(o.astype(bf16), wo, preferred_element_type=f32)

        # ---------------- MLP (SwiGLU) ----------------
        h2 = _layernorm(x).astype(bf16)
        gu = jnp.dot(h2, wgu, preferred_element_type=f32)              # (T, 2I)
        g = gu[:, :I]
        u = gu[:, I:]
        act = (g * jax.nn.sigmoid(g)) * u                              # SiLU(gate) * up
        x = x + jnp.dot(act.astype(bf16), wd, preferred_element_type=f32)

    out_ref[...] = _layernorm(x)                                       # final model norm


# --------------------------- constant-table prep ----------------------------
def _rope_base(seq_len):
    inv_freq = 1.0 / (ROPE_THETA ** (np.arange(0, HEAD_DIM, 2,
                                                dtype=np.float32) / HEAD_DIM))
    t = np.arange(seq_len, dtype=np.float32)
    freqs = np.einsum("i,j->ij", t, inv_freq)            # (S, HEAD_DIM/2)
    emb = np.concatenate([freqs, freqs], axis=-1)        # (S, HEAD_DIM)
    return np.cos(emb).astype(np.float32), np.sin(emb).astype(np.float32)


def make_constants(B, S):
    T = B * S
    P = NUM_HEADS * T
    cos_e, sin_e = _rope_base(S)                         # (S, 32)
    zeros = np.zeros((S, HALF), np.float32)
    # sin_lo multiplies x[:, d+16] (first half of each head, rotate_half sign
    # folded in); sin_hi multiplies x[:, d-16] (second half).
    sin_lo = np.concatenate([-sin_e[:, :HALF], zeros], axis=-1)
    sin_hi = np.concatenate([zeros, sin_e[:, HALF:]], axis=-1)

    def lanes(t):      # (S, 32) -> (B*S, 128): broadcast over batch & heads
        return np.tile(t, (B, NUM_HEADS)).astype(np.float32)

    rope_k = np.stack([lanes(cos_e), lanes(sin_lo), lanes(sin_hi)])     # (3, T, H)
    rope_q = (rope_k * SCALE).astype(np.float32)          # fold 1/sqrt(head_dim)

    # Additive cross-batch mask over the folded token axis, tiled per head block.
    row_b = np.arange(T) // S
    m = np.where(row_b[:, None] == row_b[None, :], 0.0, NEG_INF).astype(np.float32)
    amask = np.tile(m, (1, NUM_HEADS))                    # (T, P)

    # 0/1 head-block masks for packed attention.
    c_head = np.arange(P) // T                            # packed column -> head
    d_head = np.arange(HIDDEN) // HEAD_DIM                # hidden lane -> head
    hmask = (c_head[:, None] == d_head[None, :]).astype(np.float32)     # (P, H)
    bsum = (c_head[:, None] == c_head[None, :]).astype(np.float32)      # (P, P)

    return (jnp.asarray(rope_q), jnp.asarray(rope_k), jnp.asarray(amask),
            jnp.asarray(hmask, dtype=jnp.bfloat16), jnp.asarray(bsum))


# ------------------------------ param setup --------------------------------
def make_params(key):
    """PyTorch-style init (normal std=0.02, no biases).  nn.Linear weights are
    (out, in); pre-transpose to (in, out) and store in bf16 (kernel AND
    reference use the same bf16 weight bits)."""
    def linear(k, out_features, in_features):
        w = jax.random.normal(k, (out_features, in_features), jnp.float32) * INIT_STD
        return w.T.astype(jnp.bfloat16)

    keys = jax.random.split(key, 1 + NUM_LAYERS * 7)
    embed = jax.random.normal(keys[0], (VOCAB, HIDDEN), jnp.float32) * INIT_STD
    embed = embed.at[PAD_ID].set(0.0)                    # padding_idx zeroed

    layers = []
    ki = 1
    for _ in range(NUM_LAYERS):
        layers.append(dict(
            wq=linear(keys[ki + 0], HIDDEN, HIDDEN),
            wk=linear(keys[ki + 1], HIDDEN, HIDDEN),
            wv=linear(keys[ki + 2], HIDDEN, HIDDEN),
            wo=linear(keys[ki + 3], HIDDEN, HIDDEN),
            wg=linear(keys[ki + 4], INTERMEDIATE, HIDDEN),
            wu=linear(keys[ki + 5], INTERMEDIATE, HIDDEN),
            wd=linear(keys[ki + 6], HIDDEN, INTERMEDIATE),
        ))
        ki += 7
    return embed, layers


def stack_layer_weights(layers):
    """Fuse QKV and gate/up, stack over layers (leading layer dim, bf16)."""
    wqkv = jnp.stack([jnp.concatenate([l["wq"], l["wk"], l["wv"]], axis=1)
                      for l in layers])                       # (L, H, 3H)
    wo = jnp.stack([l["wo"] for l in layers])                 # (L, H, H)
    wgu = jnp.stack([jnp.concatenate([l["wg"], l["wu"]], axis=1)
                     for l in layers])                        # (L, H, 2I)
    wd = jnp.stack([l["wd"] for l in layers])                 # (L, I, H)
    return wqkv, wo, wgu, wd


# ----------------------------- model forward -------------------------------
def llama2_forward(input_ids, embed, stacked, consts):
    B, S = input_ids.shape
    T = B * S
    # TODO(synk): the token-embedding gather stays as plain-JAX glue (a
    # data-dependent row gather; in-kernel it would need scalar-prefetch DMA).
    x = embed[input_ids].reshape(T, HIDDEN).astype(jnp.float32)
    rope_q, rope_k, amask, hmask, bsum = consts
    wqkv, wo, wgu, wd = stacked

    out = pl.pallas_call(
        llama2_kernel,
        out_shape=jax.ShapeDtypeStruct((T, HIDDEN), jnp.float32),
        # No grid / BlockSpecs: every operand is a whole-array VMEM block
        # (total ~0.75 MiB, well under any generation's VMEM budget).
        compiler_params=pltpu.CompilerParams(vmem_limit_bytes=32 * 1024 * 1024),
    )(x, rope_q, rope_k, amask, hmask, bsum, wqkv, wo, wgu, wd)
    return out.reshape(B, S, HIDDEN)


# -------------------------- pure-JAX reference -----------------------------
def _ref_forward(input_ids, embed, layers):
    """Straightforward per-head reference with the SAME mixed-precision policy
    as the kernel (bf16 matmul inputs, f32 accumulation, f32 softmax)."""
    B, S = input_ids.shape
    cos_e, sin_e = _rope_base(S)
    cos = jnp.asarray(cos_e)[None, None]                  # (1,1,S,hd)
    sin = jnp.asarray(sin_e)[None, None]
    bf16 = jnp.bfloat16

    def mm(a, w):
        return jnp.dot(a.astype(bf16), w, preferred_element_type=jnp.float32)

    def split_heads(t):                                   # (B,S,H) -> (B,nH,S,hd)
        return t.reshape(B, S, NUM_HEADS, HEAD_DIM).transpose(0, 2, 1, 3)

    def rot_half(t):
        return jnp.concatenate([-t[..., HALF:], t[..., :HALF]], axis=-1)

    x = embed[input_ids].astype(jnp.float32)
    for w in layers:
        h = _layernorm(x)
        q = split_heads(mm(h, w["wq"]))
        k = split_heads(mm(h, w["wk"]))
        v = split_heads(mm(h, w["wv"]))
        # apply_rotary_pos_emb; the 1/sqrt(head_dim) score scale is applied to
        # q in f32 (mathematically identical to scaling the scores, and it
        # matches the kernel's bf16 rounding point).
        q = (q * cos + rot_half(q) * sin) * SCALE
        k = k * cos + rot_half(k) * sin
        att = jnp.einsum("bhqd,bhkd->bhqk", q.astype(bf16), k.astype(bf16),
                         preferred_element_type=jnp.float32)
        p = jax.nn.softmax(att, axis=-1)                  # f32 softmax (as in the spec)
        o = jnp.einsum("bhqk,bhkd->bhqd", p.astype(bf16), v.astype(bf16),
                       preferred_element_type=jnp.float32)
        o = o.transpose(0, 2, 1, 3).reshape(B, S, HIDDEN)
        x = x + mm(o, w["wo"])
        h2 = _layernorm(x)
        g = mm(h2, w["wg"])
        u = mm(h2, w["wu"])
        x = x + mm(g * jax.nn.sigmoid(g) * u, w["wd"])
    return _layernorm(x)


# --------------------------------- main -------------------------------------
if __name__ == "__main__":
    key = jax.random.PRNGKey(0)
    pkey, ikey = jax.random.split(key)
    embed, layers = make_params(pkey)
    stacked = stack_layer_weights(layers)
    consts = make_constants(BATCH, SEQ)
    input_ids = jax.random.randint(ikey, (BATCH, SEQ), 0, VOCAB, dtype=jnp.int32)

    out = llama2_forward(input_ids, embed, stacked, consts)
    out = jax.block_until_ready(out)

    ref = _ref_forward(input_ids, embed, layers)
    # Kernel and reference share weights, constants and the mixed-precision
    # policy; remaining differences are reduction-order level (~1e-5).
    np.testing.assert_allclose(np.asarray(out), np.asarray(ref),
                               rtol=2e-3, atol=2e-3)
    print("KERNEL_OK")
</pallas_src>

<mosaic_0001>
module attributes {stable_mosaic.version = 11 : i64} {
  func.func @llama2_kernel(%arg0: memref<16x128xf32, #tpu.memory_space<vmem>>, %arg1: memref<3x16x128xf32, #tpu.memory_space<vmem>>, %arg2: memref<3x16x128xf32, #tpu.memory_space<vmem>>, %arg3: memref<16x64xf32, #tpu.memory_space<vmem>>, %arg4: memref<64x128xbf16, #tpu.memory_space<vmem>>, %arg5: memref<64x64xf32, #tpu.memory_space<vmem>>, %arg6: memref<2x128x384xbf16, #tpu.memory_space<vmem>>, %arg7: memref<2x128x128xbf16, #tpu.memory_space<vmem>>, %arg8: memref<2x128x512xbf16, #tpu.memory_space<vmem>>, %arg9: memref<2x256x128xbf16, #tpu.memory_space<vmem>>, %arg10: memref<16x128xf32, #tpu.memory_space<vmem>>) attributes {dimension_semantics = [], scalar_prefetch = 0 : i64, scratch_operands = 0 : i64, tpu.core_type = #tpu.core_type<tc>} {
    %c0 = arith.constant 0 : index
    %c0_0 = arith.constant 0 : index
    %0 = vector.load %arg0[%c0, %c0_0] : memref<16x128xf32, #tpu.memory_space<vmem>>, vector<16x128xf32>
    %c0_1 = arith.constant 0 : index
    %c0_2 = arith.constant 0 : index
    %c0_3 = arith.constant 0 : index
    %1 = vector.load %arg1[%c0_1, %c0_2, %c0_3] : memref<3x16x128xf32, #tpu.memory_space<vmem>>, vector<1x16x128xf32>
    %2 = vector.shape_cast %1 : vector<1x16x128xf32> to vector<16x128xf32>
    %c1 = arith.constant 1 : index
    %c0_4 = arith.constant 0 : index
    %c0_5 = arith.constant 0 : index
    %3 = vector.load %arg1[%c1, %c0_4, %c0_5] : memref<3x16x128xf32, #tpu.memory_space<vmem>>, vector<1x16x128xf32>
    %4 = vector.shape_cast %3 : vector<1x16x128xf32> to vector<16x128xf32>
    %c2 = arith.constant 2 : index
    %c0_6 = arith.constant 0 : index
    %c0_7 = arith.constant 0 : index
    %5 = vector.load %arg1[%c2, %c0_6, %c0_7] : memref<3x16x128xf32, #tpu.memory_space<vmem>>, vector<1x16x128xf32>
    %6 = vector.shape_cast %5 : vector<1x16x128xf32> to vector<16x128xf32>
    %c0_8 = arith.constant 0 : index
    %c0_9 = arith.constant 0 : index
    %c0_10 = arith.constant 0 : index
    %7 = vector.load %arg2[%c0_8, %c0_9, %c0_10] : memref<3x16x128xf32, #tpu.memory_space<vmem>>, vector<1x16x128xf32>
    %8 = vector.shape_cast %7 : vector<1x16x128xf32> to vector<16x128xf32>
    %c1_11 = arith.constant 1 : index
    %c0_12 = arith.constant 0 : index
    %c0_13 = arith.constant 0 : index
    %9 = vector.load %arg2[%c1_11, %c0_12, %c0_13] : memref<3x16x128xf32, #tpu.memory_space<vmem>>, vector<1x16x128xf32>
    %10 = vector.shape_cast %9 : vector<1x16x128xf32> to vector<16x128xf32>
    %c2_14 = arith.constant 2 : index
    %c0_15 = arith.constant 0 : index
    %c0_16 = arith.constant 0 : index
    %11 = vector.load %arg2[%c2_14, %c0_15, %c0_16] : memref<3x16x128xf32, #tpu.memory_space<vmem>>, vector<1x16x128xf32>
    %12 = vector.shape_cast %11 : vector<1x16x128xf32> to vector<16x128xf32>
    %c0_17 = arith.constant 0 : index
    %c0_18 = arith.constant 0 : index
    %13 = vector.load %arg3[%c0_17, %c0_18] : memref<16x64xf32, #tpu.memory_space<vmem>>, vector<16x64xf32>
    %c0_19 = arith.constant 0 : index
    %c0_20 = arith.constant 0 : index
    %14 = vector.load %arg4[%c0_19, %c0_20] : memref<64x128xbf16, #tpu.memory_space<vmem>>, vector<64x128xbf16>
    %c0_21 = arith.constant 0 : index
    %c0_22 = arith.constant 0 : index
    %15 = vector.load %arg5[%c0_21, %c0_22] : memref<64x64xf32, #tpu.memory_space<vmem>>, vector<64x64xf32>
    %c0_23 = arith.constant 0 : index
    %c0_24 = arith.constant 0 : index
    %c0_25 = arith.constant 0 : index
    %16 = vector.load %arg6[%c0_23, %c0_24, %c0_25] : memref<2x128x384xbf16, #tpu.memory_space<vmem>>, vector<1x128x384xbf16>
    %17 = vector.shape_cast %16 : vector<1x128x384xbf16> to vector<128x384xbf16>
    %c0_26 = arith.constant 0 : index
    %c0_27 = arith.constant 0 : index
    %c0_28 = arith.constant 0 : index
    %18 = vector.load %arg7[%c0_26, %c0_27, %c0_28] : memref<2x128x128xbf16, #tpu.memory_space<vmem>>, vector<1x128x128xbf16>
    %19 = vector.shape_cast %18 : vector<1x128x128xbf16> to vector<128x128xbf16>
    %c0_29 = arith.constant 0 : index
    %c0_30 = arith.constant 0 : index
    %c0_31 = arith.constant 0 : index
    %20 = vector.load %arg8[%c0_29, %c0_30, %c0_31] : memref<2x128x512xbf16, #tpu.memory_space<vmem>>, vector<1x128x512xbf16>
    %21 = vector.shape_cast %20 : vector<1x128x512xbf16> to vector<128x512xbf16>
    %c0_32 = arith.constant 0 : index
    %c0_33 = arith.constant 0 : index
    %c0_34 = arith.constant 0 : index
    %22 = vector.load %arg9[%c0_32, %c0_33, %c0_34] : memref<2x256x128xbf16, #tpu.memory_space<vmem>>, vector<1x256x128xbf16>
    %23 = vector.shape_cast %22 : vector<1x256x128xbf16> to vector<256x128xbf16>
    %cst = arith.constant dense<0.000000e+00> : vector<16xf32>
    %24 = vector.multi_reduction <add>, %0, %cst [1] : vector<16x128xf32> to vector<16xf32>
    %25 = vector.shape_cast %24 : vector<16xf32> to vector<16x1xf32>
    %cst_35 = arith.constant 1.280000e+02 : f32
    %26 = vector.broadcast %cst_35 : f32 to vector<16x1xf32>
    %27 = arith.divf %25, %26 : vector<16x1xf32>
    %28 = vector.broadcast %27 : vector<16x1xf32> to vector<16x128xf32>
    %29 = arith.subf %0, %28 : vector<16x128xf32>
    %30 = arith.mulf %29, %29 : vector<16x128xf32>
    %cst_36 = arith.constant dense<0.000000e+00> : vector<16xf32>
    %31 = vector.multi_reduction <add>, %30, %cst_36 [1] : vector<16x128xf32> to vector<16xf32>
    %32 = vector.shape_cast %31 : vector<16xf32> to vector<16x1xf32>
    %cst_37 = arith.constant 1.280000e+02 : f32
    %33 = vector.broadcast %cst_37 : f32 to vector<16x1xf32>
    %34 = arith.divf %32, %33 : vector<16x1xf32>
    %35 = vector.broadcast %27 : vector<16x1xf32> to vector<16x128xf32>
    %36 = arith.subf %0, %35 : vector<16x128xf32>
    %cst_38 = arith.constant 9.99999997E-7 : f32
    %37 = vector.broadcast %cst_38 : f32 to vector<16x1xf32>
    %38 = arith.addf %34, %37 : vector<16x1xf32>
    %39 = math.rsqrt %38 : vector<16x1xf32>
    %40 = vector.broadcast %39 : vector<16x1xf32> to vector<16x128xf32>
    %41 = arith.mulf %36, %40 : vector<16x128xf32>
    %42 = arith.truncf %41 : vector<16x128xf32> to vector<16x128xbf16>
    %cst_39 = arith.constant dense<0.000000e+00> : vector<16x384xf32>
    %43 = tpu.matmul %42, %17, %cst_39 {dimension_numbers = #tpu.dot_dimension_numbers<[1], [0], [0], [1], [0, 0, 1, 1], [], []>} : vector<16x128xbf16>, vector<128x384xbf16>, vector<16x384xf32> -> vector<16x384xf32>
    %44 = vector.extract_strided_slice %43 {offsets = [0, 0], sizes = [16, 128], strides = [1, 1]} : vector<16x384xf32> to vector<16x128xf32>
    %45 = arith.mulf %44, %2 : vector<16x128xf32>
    %46 = vector.extract_strided_slice %44 {offsets = [0, 16], sizes = [16, 112], strides = [1, 1]} : vector<16x128xf32> to vector<16x112xf32>
    %47 = vector.extract_strided_slice %44 {offsets = [0, 0], sizes = [16, 16], strides = [1, 1]} : vector<16x128xf32> to vector<16x16xf32>
    %48 = tpu.concatenate %46, %47 in 1 : vector<16x112xf32>, vector<16x16xf32> -> vector<16x128xf32>
    %49 = arith.mulf %48, %4 : vector<16x128xf32>
    %50 = arith.addf %45, %49 : vector<16x128xf32>
    %51 = vector.extract_strided_slice %44 {offsets = [0, 112], sizes = [16, 16], strides = [1, 1]} : vector<16x128xf32> to vector<16x16xf32>
    %52 = vector.extract_strided_slice %44 {offsets = [0, 0], sizes = [16, 112], strides = [1, 1]} : vector<16x128xf32> to vector<16x112xf32>
    %53 = tpu.concatenate %51, %52 in 1 : vector<16x16xf32>, vector<16x112xf32> -> vector<16x128xf32>
    %54 = arith.mulf %53, %6 : vector<16x128xf32>
    %55 = arith.addf %50, %54 : vector<16x128xf32>
    %56 = vector.extract_strided_slice %43 {offsets = [0, 128], sizes = [16, 128], strides = [1, 1]} : vector<16x384xf32> to vector<16x128xf32>
    %57 = arith.mulf %56, %8 : vector<16x128xf32>
    %58 = vector.extract_strided_slice %56 {offsets = [0, 16], sizes = [16, 112], strides = [1, 1]} : vector<16x128xf32> to vector<16x112xf32>
    %59 = vector.extract_strided_slice %56 {offsets = [0, 0], sizes = [16, 16], strides = [1, 1]} : vector<16x128xf32> to vector<16x16xf32>
    %60 = tpu.concatenate %58, %59 in 1 : vector<16x112xf32>, vector<16x16xf32> -> vector<16x128xf32>
    %61 = arith.mulf %60, %10 : vector<16x128xf32>
    %62 = arith.addf %57, %61 : vector<16x128xf32>
    %63 = vector.extract_strided_slice %56 {offsets = [0, 112], sizes = [16, 16], strides = [1, 1]} : vector<16x128xf32> to vector<16x16xf32>
    %64 = vector.extract_strided_slice %56 {offsets = [0, 0], sizes = [16, 112], strides = [1, 1]} : vector<16x128xf32> to vector<16x112xf32>
    %65 = tpu.concatenate %63, %64 in 1 : vector<16x16xf32>, vector<16x112xf32> -> vector<16x128xf32>
    %66 = arith.mulf %65, %12 : vector<16x128xf32>
    %67 = arith.addf %62, %66 : vector<16x128xf32>
    %68 = vector.extract_strided_slice %43 {offsets = [0, 256], sizes = [16, 128], strides = [1, 1]} : vector<16x384xf32> to vector<16x128xf32>
    %69 = arith.truncf %67 : vector<16x128xf32> to vector<16x128xbf16>
    %70 = arith.truncf %68 : vector<16x128xf32> to vector<16x128xbf16>
    %71 = tpu.concatenate %69, %69, %69, %69 in 0 : vector<16x128xbf16>, vector<16x128xbf16>, vector<16x128xbf16>, vector<16x128xbf16> -> vector<64x128xbf16>
    %72 = arith.mulf %71, %14 : vector<64x128xbf16>
    %73 = tpu.concatenate %70, %70, %70, %70 in 0 : vector<16x128xbf16>, vector<16x128xbf16>, vector<16x128xbf16>, vector<16x128xbf16> -> vector<64x128xbf16>
    %74 = arith.mulf %73, %14 : vector<64x128xbf16>
    %75 = arith.truncf %55 : vector<16x128xf32> to vector<16x128xbf16>
    %cst_40 = arith.constant dense<0.000000e+00> : vector<16x64xf32>
    %76 = tpu.matmul %75, %72, %cst_40 {dimension_numbers = #tpu.dot_dimension_numbers<[1], [1], [0], [0], [0, 0, 1, 0], [], []>} : vector<16x128xbf16>, vector<64x128xbf16>, vector<16x64xf32> -> vector<16x64xf32>
    %77 = arith.addf %76, %13 : vector<16x64xf32>
    %cst_41 = arith.constant dense<0xFF800000> : vector<16xf32>
    %78 = vector.multi_reduction <maximumf>, %77, %cst_41 [1] : vector<16x64xf32> to vector<16xf32>
    %79 = vector.shape_cast %78 : vector<16xf32> to vector<16x1xf32>
    %80 = vector.broadcast %79 : vector<16x1xf32> to vector<16x64xf32>
    %81 = arith.subf %77, %80 : vector<16x64xf32>
    %82 = math.exp %81 : vector<16x64xf32>
    %cst_42 = arith.constant dense<0.000000e+00> : vector<16x64xf32>
    %83 = tpu.matmul %82, %15, %cst_42 {dimension_numbers = #tpu.dot_dimension_numbers<[1], [0], [0], [1], [0, 0, 1, 1], [], []>} : vector<16x64xf32>, vector<64x64xf32>, vector<16x64xf32> -> vector<16x64xf32>
    %84 = arith.divf %82, %83 : vector<16x64xf32>
    %85 = arith.truncf %84 : vector<16x64xf32> to vector<16x64xbf16>
    %cst_43 = arith.constant dense<0.000000e+00> : vector<16x128xf32>
    %86 = tpu.matmul %85, %74, %cst_43 {dimension_numbers = #tpu.dot_dimension_numbers<[1], [0], [0], [1], [0, 0, 1, 1], [], []>} : vector<16x64xbf16>, vector<64x128xbf16>, vector<16x128xf32> -> vector<16x128xf32>
    %87 = arith.truncf %86 : vector<16x128xf32> to vector<16x128xbf16>
    %cst_44 = arith.constant dense<0.000000e+00> : vector<16x128xf32>
    %88 = tpu.matmul %87, %19, %cst_44 {dimension_numbers = #tpu.dot_dimension_numbers<[1], [0], [0], [1], [0, 0, 1, 1], [], []>} : vector<16x128xbf16>, vector<128x128xbf16>, vector<16x128xf32> -> vector<16x128xf32>
    %89 = arith.addf %0, %88 : vector<16x128xf32>
    %cst_45 = arith.constant dense<0.000000e+00> : vector<16xf32>
    %90 = vector.multi_reduction <add>, %89, %cst_45 [1] : vector<16x128xf32> to vector<16xf32>
    %91 = vector.shape_cast %90 : vector<16xf32> to vector<16x1xf32>
    %cst_46 = arith.constant 1.280000e+02 : f32
    %92 = vector.broadcast %cst_46 : f32 to vector<16x1xf32>
    %93 = arith.divf %91, %92 : vector<16x1xf32>
    %94 = vector.broadcast %93 : vector<16x1xf32> to vector<16x128xf32>
    %95 = arith.subf %89, %94 : vector<16x128xf32>
    %96 = arith.mulf %95, %95 : vector<16x128xf32>
    %cst_47 = arith.constant dense<0.000000e+00> : vector<16xf32>
    %97 = vector.multi_reduction <add>, %96, %cst_47 [1] : vector<16x128xf32> to vector<16xf32>
    %98 = vector.shape_cast %97 : vector<16xf32> to vector<16x1xf32>
    %cst_48 = arith.constant 1.280000e+02 : f32
    %99 = vector.broadcast %cst_48 : f32 to vector<16x1xf32>
    %100 = arith.divf %98, %99 : vector<16x1xf32>
    %101 = vector.broadcast %93 : vector<16x1xf32> to vector<16x128xf32>
    %102 = arith.subf %89, %101 : vector<16x128xf32>
    %cst_49 = arith.constant 9.99999997E-7 : f32
    %103 = vector.broadcast %cst_49 : f32 to vector<16x1xf32>
    %104 = arith.addf %100, %103 : vector<16x1xf32>
    %105 = math.rsqrt %104 : vector<16x1xf32>
    %106 = vector.broadcast %105 : vector<16x1xf32> to vector<16x128xf32>
    %107 = arith.mulf %102, %106 : vector<16x128xf32>
    %108 = arith.truncf %107 : vector<16x128xf32> to vector<16x128xbf16>
    %cst_50 = arith.constant dense<0.000000e+00> : vector<16x512xf32>
    %109 = tpu.matmul %108, %21, %cst_50 {dimension_numbers = #tpu.dot_dimension_numbers<[1], [0], [0], [1], [0, 0, 1, 1], [], []>} : vector<16x128xbf16>, vector<128x512xbf16>, vector<16x512xf32> -> vector<16x512xf32>
    %110 = vector.extract_strided_slice %109 {offsets = [0, 0], sizes = [16, 256], strides = [1, 1]} : vector<16x512xf32> to vector<16x256xf32>
    %111 = vector.extract_strided_slice %109 {offsets = [0, 256], sizes = [16, 256], strides = [1, 1]} : vector<16x512xf32> to vector<16x256xf32>
    %112 = arith.negf %110 : vector<16x256xf32>
    %113 = math.exp %112 : vector<16x256xf32>
    %cst_51 = arith.constant 1.000000e+00 : f32
    %114 = vector.broadcast %cst_51 : f32 to vector<16x256xf32>
    %115 = arith.addf %114, %113 : vector<16x256xf32>
    %116 = arith.divf %114, %115 : vector<16x256xf32>
    %117 = arith.mulf %110, %116 : vector<16x256xf32>
    %118 = arith.mulf %117, %111 : vector<16x256xf32>
    %119 = arith.truncf %118 : vector<16x256xf32> to vector<16x256xbf16>
    %cst_52 = arith.constant dense<0.000000e+00> : vector<16x128xf32>
    %120 = tpu.matmul %119, %23, %cst_52 {dimension_numbers = #tpu.dot_dimension_numbers<[1], [0], [0], [1], [0, 0, 1, 1], [], []>} : vector<16x256xbf16>, vector<256x128xbf16>, vector<16x128xf32> -> vector<16x128xf32>
    %121 = arith.addf %89, %120 : vector<16x128xf32>
    %c1_53 = arith.constant 1 : index
    %c0_54 = arith.constant 0 : index
    %c0_55 = arith.constant 0 : index
    %122 = vector.load %arg6[%c1_53, %c0_54, %c0_55] : memref<2x128x384xbf16, #tpu.memory_space<vmem>>, vector<1x128x384xbf16>
    %123 = vector.shape_cast %122 : vector<1x128x384xbf16> to vector<128x384xbf16>
    %c1_56 = arith.constant 1 : index
    %c0_57 = arith.constant 0 : index
    %c0_58 = arith.constant 0 : index
    %124 = vector.load %arg7[%c1_56, %c0_57, %c0_58] : memref<2x128x128xbf16, #tpu.memory_space<vmem>>, vector<1x128x128xbf16>
    %125 = vector.shape_cast %124 : vector<1x128x128xbf16> to vector<128x128xbf16>
    %c1_59 = arith.constant 1 : index
    %c0_60 = arith.constant 0 : index
    %c0_61 = arith.constant 0 : index
    %126 = vector.load %arg8[%c1_59, %c0_60, %c0_61] : memref<2x128x512xbf16, #tpu.memory_space<vmem>>, vector<1x128x512xbf16>
    %127 = vector.shape_cast %126 : vector<1x128x512xbf16> to vector<128x512xbf16>
    %c1_62 = arith.constant 1 : index
    %c0_63 = arith.constant 0 : index
    %c0_64 = arith.constant 0 : index
    %128 = vector.load %arg9[%c1_62, %c0_63, %c0_64] : memref<2x256x128xbf16, #tpu.memory_space<vmem>>, vector<1x256x128xbf16>
    %129 = vector.shape_cast %128 : vector<1x256x128xbf16> to vector<256x128xbf16>
    %cst_65 = arith.constant dense<0.000000e+00> : vector<16xf32>
    %130 = vector.multi_reduction <add>, %121, %cst_65 [1] : vector<16x128xf32> to vector<16xf32>
    %131 = vector.shape_cast %130 : vector<16xf32> to vector<16x1xf32>
    %cst_66 = arith.constant 1.280000e+02 : f32
    %132 = vector.broadcast %cst_66 : f32 to vector<16x1xf32>
    %133 = arith.divf %131, %132 : vector<16x1xf32>
    %134 = vector.broadcast %133 : vector<16x1xf32> to vector<16x128xf32>
    %135 = arith.subf %121, %134 : vector<16x128xf32>
    %136 = arith.mulf %135, %135 : vector<16x128xf32>
    %cst_67 = arith.constant dense<0.000000e+00> : vector<16xf32>
    %137 = vector.multi_reduction <add>, %136, %cst_67 [1] : vector<16x128xf32> to vector<16xf32>
    %138 = vector.shape_cast %137 : vector<16xf32> to vector<16x1xf32>
    %cst_68 = arith.constant 1.280000e+02 : f32
    %139 = vector.broadcast %cst_68 : f32 to vector<16x1xf32>
    %140 = arith.divf %138, %139 : vector<16x1xf32>
    %141 = vector.broadcast %133 : vector<16x1xf32> to vector<16x128xf32>
    %142 = arith.subf %121, %141 : vector<16x128xf32>
    %cst_69 = arith.constant 9.99999997E-7 : f32
    %143 = vector.broadcast %cst_69 : f32 to vector<16x1xf32>
    %144 = arith.addf %140, %143 : vector<16x1xf32>
    %145 = math.rsqrt %144 : vector<16x1xf32>
    %146 = vector.broadcast %145 : vector<16x1xf32> to vector<16x128xf32>
    %147 = arith.mulf %142, %146 : vector<16x128xf32>
    %148 = arith.truncf %147 : vector<16x128xf32> to vector<16x128xbf16>
    %cst_70 = arith.constant dense<0.000000e+00> : vector<16x384xf32>
    %149 = tpu.matmul %148, %123, %cst_70 {dimension_numbers = #tpu.dot_dimension_numbers<[1], [0], [0], [1], [0, 0, 1, 1], [], []>} : vector<16x128xbf16>, vector<128x384xbf16>, vector<16x384xf32> -> vector<16x384xf32>
    %150 = vector.extract_strided_slice %149 {offsets = [0, 0], sizes = [16, 128], strides = [1, 1]} : vector<16x384xf32> to vector<16x128xf32>
    %151 = arith.mulf %150, %2 : vector<16x128xf32>
    %152 = vector.extract_strided_slice %150 {offsets = [0, 16], sizes = [16, 112], strides = [1, 1]} : vector<16x128xf32> to vector<16x112xf32>
    %153 = vector.extract_strided_slice %150 {offsets = [0, 0], sizes = [16, 16], strides = [1, 1]} : vector<16x128xf32> to vector<16x16xf32>
    %154 = tpu.concatenate %152, %153 in 1 : vector<16x112xf32>, vector<16x16xf32> -> vector<16x128xf32>
    %155 = arith.mulf %154, %4 : vector<16x128xf32>
    %156 = arith.addf %151, %155 : vector<16x128xf32>
    %157 = vector.extract_strided_slice %150 {offsets = [0, 112], sizes = [16, 16], strides = [1, 1]} : vector<16x128xf32> to vector<16x16xf32>
    %158 = vector.extract_strided_slice %150 {offsets = [0, 0], sizes = [16, 112], strides = [1, 1]} : vector<16x128xf32> to vector<16x112xf32>
    %159 = tpu.concatenate %157, %158 in 1 : vector<16x16xf32>, vector<16x112xf32> -> vector<16x128xf32>
    %160 = arith.mulf %159, %6 : vector<16x128xf32>
    %161 = arith.addf %156, %160 : vector<16x128xf32>
    %162 = vector.extract_strided_slice %149 {offsets = [0, 128], sizes = [16, 128], strides = [1, 1]} : vector<16x384xf32> to vector<16x128xf32>
    %163 = arith.mulf %162, %8 : vector<16x128xf32>
    %164 = vector.extract_strided_slice %162 {offsets = [0, 16], sizes = [16, 112], strides = [1, 1]} : vector<16x128xf32> to vector<16x112xf32>
    %165 = vector.extract_strided_slice %162 {offsets = [0, 0], sizes = [16, 16], strides = [1, 1]} : vector<16x128xf32> to vector<16x16xf32>
    %166 = tpu.concatenate %164, %165 in 1 : vector<16x112xf32>, vector<16x16xf32> -> vector<16x128xf32>
    %167 = arith.mulf %166, %10 : vector<16x128xf32>
    %168 = arith.addf %163, %167 : vector<16x128xf32>
    %169 = vector.extract_strided_slice %162 {offsets = [0, 112], sizes = [16, 16], strides = [1, 1]} : vector<16x128xf32> to vector<16x16xf32>
    %170 = vector.extract_strided_slice %162 {offsets = [0, 0], sizes = [16, 112], strides = [1, 1]} : vector<16x128xf32> to vector<16x112xf32>
    %171 = tpu.concatenate %169, %170 in 1 : vector<16x16xf32>, vector<16x112xf32> -> vector<16x128xf32>
    %172 = arith.mulf %171, %12 : vector<16x128xf32>
    %173 = arith.addf %168, %172 : vector<16x128xf32>
    %174 = vector.extract_strided_slice %149 {offsets = [0, 256], sizes = [16, 128], strides = [1, 1]} : vector<16x384xf32> to vector<16x128xf32>
    %175 = arith.truncf %173 : vector<16x128xf32> to vector<16x128xbf16>
    %176 = arith.truncf %174 : vector<16x128xf32> to vector<16x128xbf16>
    %177 = tpu.concatenate %175, %175, %175, %175 in 0 : vector<16x128xbf16>, vector<16x128xbf16>, vector<16x128xbf16>, vector<16x128xbf16> -> vector<64x128xbf16>
    %178 = arith.mulf %177, %14 : vector<64x128xbf16>
    %179 = tpu.concatenate %176, %176, %176, %176 in 0 : vector<16x128xbf16>, vector<16x128xbf16>, vector<16x128xbf16>, vector<16x128xbf16> -> vector<64x128xbf16>
    %180 = arith.mulf %179, %14 : vector<64x128xbf16>
    %181 = arith.truncf %161 : vector<16x128xf32> to vector<16x128xbf16>
    %cst_71 = arith.constant dense<0.000000e+00> : vector<16x64xf32>
    %182 = tpu.matmul %181, %178, %cst_71 {dimension_numbers = #tpu.dot_dimension_numbers<[1], [1], [0], [0], [0, 0, 1, 0], [], []>} : vector<16x128xbf16>, vector<64x128xbf16>, vector<16x64xf32> -> vector<16x64xf32>
    %183 = arith.addf %182, %13 : vector<16x64xf32>
    %cst_72 = arith.constant dense<0xFF800000> : vector<16xf32>
    %184 = vector.multi_reduction <maximumf>, %183, %cst_72 [1] : vector<16x64xf32> to vector<16xf32>
    %185 = vector.shape_cast %184 : vector<16xf32> to vector<16x1xf32>
    %186 = vector.broadcast %185 : vector<16x1xf32> to vector<16x64xf32>
    %187 = arith.subf %183, %186 : vector<16x64xf32>
    %188 = math.exp %187 : vector<16x64xf32>
    %cst_73 = arith.constant dense<0.000000e+00> : vector<16x64xf32>
    %189 = tpu.matmul %188, %15, %cst_73 {dimension_numbers = #tpu.dot_dimension_numbers<[1], [0], [0], [1], [0, 0, 1, 1], [], []>} : vector<16x64xf32>, vector<64x64xf32>, vector<16x64xf32> -> vector<16x64xf32>
    %190 = arith.divf %188, %189 : vector<16x64xf32>
    %191 = arith.truncf %190 : vector<16x64xf32> to vector<16x64xbf16>
    %cst_74 = arith.constant dense<0.000000e+00> : vector<16x128xf32>
    %192 = tpu.matmul %191, %180, %cst_74 {dimension_numbers = #tpu.dot_dimension_numbers<[1], [0], [0], [1], [0, 0, 1, 1], [], []>} : vector<16x64xbf16>, vector<64x128xbf16>, vector<16x128xf32> -> vector<16x128xf32>
    %193 = arith.truncf %192 : vector<16x128xf32> to vector<16x128xbf16>
    %cst_75 = arith.constant dense<0.000000e+00> : vector<16x128xf32>
    %194 = tpu.matmul %193, %125, %cst_75 {dimension_numbers = #tpu.dot_dimension_numbers<[1], [0], [0], [1], [0, 0, 1, 1], [], []>} : vector<16x128xbf16>, vector<128x128xbf16>, vector<16x128xf32> -> vector<16x128xf32>
    %195 = arith.addf %121, %194 : vector<16x128xf32>
    %cst_76 = arith.constant dense<0.000000e+00> : vector<16xf32>
    %196 = vector.multi_reduction <add>, %195, %cst_76 [1] : vector<16x128xf32> to vector<16xf32>
    %197 = vector.shape_cast %196 : vector<16xf32> to vector<16x1xf32>
    %cst_77 = arith.constant 1.280000e+02 : f32
    %198 = vector.broadcast %cst_77 : f32 to vector<16x1xf32>
    %199 = arith.divf %197, %198 : vector<16x1xf32>
    %200 = vector.broadcast %199 : vector<16x1xf32> to vector<16x128xf32>
    %201 = arith.subf %195, %200 : vector<16x128xf32>
    %202 = arith.mulf %201, %201 : vector<16x128xf32>
    %cst_78 = arith.constant dense<0.000000e+00> : vector<16xf32>
    %203 = vector.multi_reduction <add>, %202, %cst_78 [1] : vector<16x128xf32> to vector<16xf32>
    %204 = vector.shape_cast %203 : vector<16xf32> to vector<16x1xf32>
    %cst_79 = arith.constant 1.280000e+02 : f32
    %205 = vector.broadcast %cst_79 : f32 to vector<16x1xf32>
    %206 = arith.divf %204, %205 : vector<16x1xf32>
    %207 = vector.broadcast %199 : vector<16x1xf32> to vector<16x128xf32>
    %208 = arith.subf %195, %207 : vector<16x128xf32>
    %cst_80 = arith.constant 9.99999997E-7 : f32
    %209 = vector.broadcast %cst_80 : f32 to vector<16x1xf32>
    %210 = arith.addf %206, %209 : vector<16x1xf32>
    %211 = math.rsqrt %210 : vector<16x1xf32>
    %212 = vector.broadcast %211 : vector<16x1xf32> to vector<16x128xf32>
    %213 = arith.mulf %208, %212 : vector<16x128xf32>
    %214 = arith.truncf %213 : vector<16x128xf32> to vector<16x128xbf16>
    %cst_81 = arith.constant dense<0.000000e+00> : vector<16x512xf32>
    %215 = tpu.matmul %214, %127, %cst_81 {dimension_numbers = #tpu.dot_dimension_numbers<[1], [0], [0], [1], [0, 0, 1, 1], [], []>} : vector<16x128xbf16>, vector<128x512xbf16>, vector<16x512xf32> -> vector<16x512xf32>
    %216 = vector.extract_strided_slice %215 {offsets = [0, 0], sizes = [16, 256], strides = [1, 1]} : vector<16x512xf32> to vector<16x256xf32>
    %217 = vector.extract_strided_slice %215 {offsets = [0, 256], sizes = [16, 256], strides = [1, 1]} : vector<16x512xf32> to vector<16x256xf32>
    %218 = arith.negf %216 : vector<16x256xf32>
    %219 = math.exp %218 : vector<16x256xf32>
    %cst_82 = arith.constant 1.000000e+00 : f32
    %220 = vector.broadcast %cst_82 : f32 to vector<16x256xf32>
    %221 = arith.addf %220, %219 : vector<16x256xf32>
    %222 = arith.divf %220, %221 : vector<16x256xf32>
    %223 = arith.mulf %216, %222 : vector<16x256xf32>
    %224 = arith.mulf %223, %217 : vector<16x256xf32>
    %225 = arith.truncf %224 : vector<16x256xf32> to vector<16x256xbf16>
    %cst_83 = arith.constant dense<0.000000e+00> : vector<16x128xf32>
    %226 = tpu.matmul %225, %129, %cst_83 {dimension_numbers = #tpu.dot_dimension_numbers<[1], [0], [0], [1], [0, 0, 1, 1], [], []>} : vector<16x256xbf16>, vector<256x128xbf16>, vector<16x128xf32> -> vector<16x128xf32>
    %227 = arith.addf %195, %226 : vector<16x128xf32>
    %cst_84 = arith.constant dense<0.000000e+00> : vector<16xf32>
    %228 = vector.multi_reduction <add>, %227, %cst_84 [1] : vector<16x128xf32> to vector<16xf32>
    %229 = vector.shape_cast %228 : vector<16xf32> to vector<16x1xf32>
    %cst_85 = arith.constant 1.280000e+02 : f32
    %230 = vector.broadcast %cst_85 : f32 to vector<16x1xf32>
    %231 = arith.divf %229, %230 : vector<16x1xf32>
    %232 = vector.broadcast %231 : vector<16x1xf32> to vector<16x128xf32>
    %233 = arith.subf %227, %232 : vector<16x128xf32>
    %234 = arith.mulf %233, %233 : vector<16x128xf32>
    %cst_86 = arith.constant dense<0.000000e+00> : vector<16xf32>
    %235 = vector.multi_reduction <add>, %234, %cst_86 [1] : vector<16x128xf32> to vector<16xf32>
    %236 = vector.shape_cast %235 : vector<16xf32> to vector<16x1xf32>
    %cst_87 = arith.constant 1.280000e+02 : f32
    %237 = vector.broadcast %cst_87 : f32 to vector<16x1xf32>
    %238 = arith.divf %236, %237 : vector<16x1xf32>
    %239 = vector.broadcast %231 : vector<16x1xf32> to vector<16x128xf32>
    %240 = arith.subf %227, %239 : vector<16x128xf32>
    %cst_88 = arith.constant 9.99999997E-7 : f32
    %241 = vector.broadcast %cst_88 : f32 to vector<16x1xf32>
    %242 = arith.addf %238, %241 : vector<16x1xf32>
    %243 = math.rsqrt %242 : vector<16x1xf32>
    %244 = vector.broadcast %243 : vector<16x1xf32> to vector<16x128xf32>
    %245 = arith.mulf %240, %244 : vector<16x128xf32>
    %c0_89 = arith.constant 0 : index
    %c0_90 = arith.constant 0 : index
    %246 = vector.load %arg10[%c0_89, %c0_90] : memref<16x128xf32, #tpu.memory_space<vmem>>, vector<16x128xf32>
    tpu.vector_store %arg10[%c0_89, %c0_90], %245 {strides = array<i32>} : memref<16x128xf32, #tpu.memory_space<vmem>>, vector<16x128xf32>,
    return
  }
}

</mosaic_0001>

<llo_original>
// kernel: tpu_custom_call.1
$region0: #{tpu_custom_call.1}
  #allocation0 [shape = 'u32[]', space=smem, size = 0x4, offset = 0x4, fixed_abs, tag = 'smem constant byte address 0x4 - core index']
  #allocation1 [shape = 'u32[72,128]{1,0:T(1,128)}', space=vmem, size = 0x9000, scoped, tag = 'internal scratch']
  %s0 = inlined_call_operand.hbm [shape: f32[16,128], index: 0, kind: input, shape index: {}]
  %s1 = inlined_call_operand.hbm [shape: f32[3,16,128], index: 1, kind: input, shape index: {}]
  %s2 = inlined_call_operand.hbm [shape: f32[3,16,128], index: 2, kind: input, shape index: {}]
  %s3 = inlined_call_operand.hbm [shape: f32[16,64], index: 3, kind: input, shape index: {}]
  %s4 = inlined_call_operand.hbm [shape: bf16[64,128], index: 4, kind: input, shape index: {}]
  %s5 = inlined_call_operand.hbm [shape: f32[64,64], index: 5, kind: input, shape index: {}]
  %s6 = inlined_call_operand.hbm [shape: bf16[2,128,384], index: 6, kind: input, shape index: {}]
  %s7 = inlined_call_operand.hbm [shape: bf16[2,128,128], index: 7, kind: input, shape index: {}]
  %s8 = inlined_call_operand.hbm [shape: bf16[2,128,512], index: 8, kind: input, shape index: {}]
  %s9 = inlined_call_operand.hbm [shape: bf16[2,256,128], index: 9, kind: input, shape index: {}]
  %s10 = inlined_call_operand.hbm [shape: f32[16,128], index: 10, kind: output, shape index: {}]
  %s11 = sld [smem:[#allocation0]]
  $region90: #{tpu_custom_call.1} parent=0
    _
  %s13 = ssub.s32 1, %s11
  %s14 = scalar_select 0, %s13, %s11
  $region1: #{tpu_custom_call.1} parent=0
    #allocation2 [shape = 'u8[8192]{0}', space=vmem, size = 0x2000, scoped, tag = 'input window, operand 0, single buffered']
    #allocation3 [shape = 's32[1]{0}', space=sflag, size = 0x4, scoped, tag = 'scoped memory for tpu_custom_call.1']
    #allocation4 [shape = 's32[1]{0}', space=sflag, size = 0x4, scoped, tag = 'scoped memory for tpu_custom_call.1']
    #allocation5 [shape = 'u8[24576]{0}', space=vmem, size = 0x6000, scoped, tag = 'input window, operand 1, single buffered']
    #allocation6 [shape = 's32[1]{0}', space=sflag, size = 0x4, scoped, tag = 'scoped memory for tpu_custom_call.1']
    #allocation7 [shape = 'u8[24576]{0}', space=vmem, size = 0x6000, scoped, tag = 'input window, operand 2, single buffered']
    #allocation8 [shape = 'u8[8192]{0}', space=vmem, size = 0x2000, scoped, tag = 'input window, operand 3, single buffered']
    #allocation9 [shape = 's32[1]{0}', space=sflag, size = 0x4, scoped, tag = 'scoped memory for tpu_custom_call.1']
    #allocation10 [shape = 'u8[16384]{0}', space=vmem, size = 0x4000, scoped, tag = 'input window, operand 4, single buffered']
    #allocation11 [shape = 'u8[32768]{0}', space=vmem, size = 0x8000, scoped, tag = 'input window, operand 5, single buffered']
    #allocation12 [shape = 's32[1]{0}', space=sflag, size = 0x4, scoped, tag = 'scoped memory for tpu_custom_call.1']
    #allocation13 [shape = 'u8[196608]{0}', space=vmem, size = 0x30000, scoped, tag = 'input window, operand 6, single buffered']
    #allocation14 [shape = 'u8[65536]{0}', space=vmem, size = 0x10000, scoped, tag = 'input window, operand 7, single buffered']
    #allocation15 [shape = 's32[1]{0}', space=sflag, size = 0x4, scoped, tag = 'scoped memory for tpu_custom_call.1']
    #allocation16 [shape = 'u8[262144]{0}', space=vmem, size = 0x40000, scoped, tag = 'input window, operand 8, single buffered']
    #allocation17 [shape = 'u8[131072]{0}', space=vmem, size = 0x20000, scoped, tag = 'input window, operand 9, single buffered']
    #allocation18 [shape = 's32[1]{0}', space=sflag, size = 0x4, scoped, tag = 'scoped memory for tpu_custom_call.1']
    #allocation19 [shape = 'u8[8192]{0}', space=vmem, size = 0x2000, scoped, tag = 'output window, operand 0, single buffered']
    %15 = vsyncpa [#allocation3], 0
    %16 = vsyncpa [#allocation6], 0
    %17 = vsyncpa [#allocation9], 0
    %18 = vsyncpa [#allocation12], 0
    %19 = vsyncpa [#allocation15], 0
    %20 = vsyncpa [#allocation18], 0
    %21 = vsyncpa [#allocation4], 0
    // Predicated region
    $region2: #{tpu_custom_call.1} parent=1 // pred_check
      _
    $region3: #{tpu_custom_call.1} parent=1 // pred_check_branch
      %23 = sbr.rel (0) target = $region5
    $region4: #{tpu_custom_call.1} parent=1 // pred_region
      %25 = vsyncadd [#allocation3], 0
      %s26 = sshll.u32 %s0, 4
      %s27 = int_to_ptr.hbm [resolvable:$true] %s26
      %s28 = sshll.u32 [#allocation2], 4
      %s29 = int_to_ptr.vmem [resolvable:$true] %s28
      %34 = dma.hbm_to_vmem [thread:$0]  %s27, 256, %s29, [#allocation3], 128, 128, 8
    $region5: #{tpu_custom_call.1} parent=1 // pred_fallthru
      _
    // Predicated region
    $region6: #{tpu_custom_call.1} parent=1 // pred_check
      _
    $region7: #{tpu_custom_call.1} parent=1 // pred_check_branch
      %36 = sbr.rel (0) target = $region9
    $region8: #{tpu_custom_call.1} parent=1 // pred_region
      %38 = vsyncadd [#allocation6], 0
      %s39 = sshll.u32 %s1, 4
      %s40 = int_to_ptr.hbm [resolvable:$true] %s39
      %s41 = sshll.u32 [#allocation5], 4
      %s42 = int_to_ptr.vmem [resolvable:$true] %s41
      %47 = dma.hbm_to_vmem [thread:$0]  %s40, 768, %s42, [#allocation6], 128, 128, 8
    $region9: #{tpu_custom_call.1} parent=1 // pred_fallthru
      _
    // Predicated region
    $region10: #{tpu_custom_call.1} parent=1 // pred_check
      _
    $region11: #{tpu_custom_call.1} parent=1 // pred_check_branch
      %49 = sbr.rel (0) target = $region13
    $region12: #{tpu_custom_call.1} parent=1 // pred_region
      %51 = vsyncadd [#allocation6], 0
      %s52 = sshll.u32 %s2, 4
      %s53 = int_to_ptr.hbm [resolvable:$true] %s52
      %s54 = sshll.u32 [#allocation7], 4
      %s55 = int_to_ptr.vmem [resolvable:$true] %s54
      %60 = dma.hbm_to_vmem [thread:$0]  %s53, 768, %s55, [#allocation6], 128, 128, 8
    $region13: #{tpu_custom_call.1} parent=1 // pred_fallthru
      _
    // Predicated region
    $region14: #{tpu_custom_call.1} parent=1 // pred_check
      _
    $region15: #{tpu_custom_call.1} parent=1 // pred_check_branch
      %62 = sbr.rel (0) target = $region17
    $region16: #{tpu_custom_call.1} parent=1 // pred_region
      %64 = vsyncadd [#allocation9], 0
      %s65 = sshll.u32 %s3, 4
      %s66 = int_to_ptr.hbm [resolvable:$true] %s65
      %s67 = sshll.u32 [#allocation8], 4
      %s68 = int_to_ptr.vmem [resolvable:$true] %s67
      %73 = dma.hbm_to_vmem [thread:$0]  %s66, 256, %s68, [#allocation9], 128, 128, 8
    $region17: #{tpu_custom_call.1} parent=1 // pred_fallthru
      _
    // Predicated region
    $region18: #{tpu_custom_call.1} parent=1 // pred_check
      _
    $region19: #{tpu_custom_call.1} parent=1 // pred_check_branch
      %75 = sbr.rel (0) target = $region21
    $region20: #{tpu_custom_call.1} parent=1 // pred_region
      %77 = vsyncadd [#allocation9], 0
      %s78 = sshll.u32 %s4, 4
      %s79 = int_to_ptr.hbm [resolvable:$true] %s78
      %s80 = sshll.u32 [#allocation10], 4
      %s81 = int_to_ptr.vmem [resolvable:$true] %s80
      %86 = dma.hbm_to_vmem [thread:$0]  %s79, 512, %s81, [#allocation9], 64, 64, 4
    $region21: #{tpu_custom_call.1} parent=1 // pred_fallthru
      _
    // Predicated region
    $region22: #{tpu_custom_call.1} parent=1 // pred_check
      _
    $region23: #{tpu_custom_call.1} parent=1 // pred_check_branch
      %88 = sbr.rel (0) target = $region25
    $region24: #{tpu_custom_call.1} parent=1 // pred_region
      %90 = vsyncadd [#allocation12], 0
      %s91 = sshll.u32 %s5, 4
      %s92 = int_to_ptr.hbm [resolvable:$true] %s91
      %s93 = sshll.u32 [#allocation11], 4
      %s94 = int_to_ptr.vmem [resolvable:$true] %s93
      %99 = dma.hbm_to_vmem [thread:$0]  %s92, 1024, %s94, [#allocation12], 128, 128, 8
    $region25: #{tpu_custom_call.1} parent=1 // pred_fallthru
      _
    // Predicated region
    $region26: #{tpu_custom_call.1} parent=1 // pred_check
      _
    $region27: #{tpu_custom_call.1} parent=1 // pred_check_branch
      %101 = sbr.rel (0) target = $region29
    $region28: #{tpu_custom_call.1} parent=1 // pred_region
      %103 = vsyncadd [#allocation12], 0
      %s104 = sshll.u32 %s6, 4
      %s105 = int_to_ptr.hbm [resolvable:$true] %s104
      %s106 = sshll.u32 [#allocation13], 4
      %s107 = int_to_ptr.vmem [resolvable:$true] %s106
      %112 = dma.hbm_to_vmem [thread:$0]  %s105, 6144, %s107, [#allocation12], 192, 192, 12
    $region29: #{tpu_custom_call.1} parent=1 // pred_fallthru
      _
    // Predicated region
    $region30: #{tpu_custom_call.1} parent=1 // pred_check
      _
    $region31: #{tpu_custom_call.1} parent=1 // pred_check_branch
      %114 = sbr.rel (0) target = $region33
    $region32: #{tpu_custom_call.1} parent=1 // pred_region
      %116 = vsyncadd [#allocation15], 0
      %s117 = sshll.u32 %s7, 4
      %s118 = int_to_ptr.hbm [resolvable:$true] %s117
      %s119 = sshll.u32 [#allocation14], 4
      %s120 = int_to_ptr.vmem [resolvable:$true] %s119
      %125 = dma.hbm_to_vmem [thread:$0]  %s118, 2048, %s120, [#allocation15], 64, 64, 4
    $region33: #{tpu_custom_call.1} parent=1 // pred_fallthru
      _
    // Predicated region
    $region34: #{tpu_custom_call.1} parent=1 // pred_check
      _
    $region35: #{tpu_custom_call.1} parent=1 // pred_check_branch
      %127 = sbr.rel (0) target = $region37
    $region36: #{tpu_custom_call.1} parent=1 // pred_region
      %129 = vsyncadd [#allocation15], 0
      %s130 = sshll.u32 %s8, 4
      %s131 = int_to_ptr.hbm [resolvable:$true] %s130
      %s132 = sshll.u32 [#allocation16], 4
      %s133 = int_to_ptr.vmem [resolvable:$true] %s132
      %138 = dma.hbm_to_vmem [thread:$0]  %s131, 8192, %s133, [#allocation15], 256, 256, 16
    $region37: #{tpu_custom_call.1} parent=1 // pred_fallthru
      _
    // Predicated region
    $region38: #{tpu_custom_call.1} parent=1 // pred_check
      _
    $region39: #{tpu_custom_call.1} parent=1 // pred_check_branch
      %140 = sbr.rel (0) target = $region41
    $region40: #{tpu_custom_call.1} parent=1 // pred_region
      %142 = vsyncadd [#allocation18], 0
      %s143 = sshll.u32 %s9, 4
      %s144 = int_to_ptr.hbm [resolvable:$true] %s143
      %s145 = sshll.u32 [#allocation17], 4
      %s146 = int_to_ptr.vmem [resolvable:$true] %s145
      %151 = dma.hbm_to_vmem [thread:$0]  %s144, 4096, %s146, [#allocation18], 64, 64, 4
    $region41: #{tpu_custom_call.1} parent=1 // pred_fallthru
      _
    // Predicated region
    $region42: #{tpu_custom_call.1} parent=1 // pred_check
      _
    $region43: #{tpu_custom_call.1} parent=1 // pred_check_branch
      %153 = sbr.rel (0) target = $region45
    $region44: #{tpu_custom_call.1} parent=1 // pred_region
      %155 = dma.done [#allocation3], 256
    $region45: #{tpu_custom_call.1} parent=1 // pred_fallthru
      _
    // Predicated region
    $region46: #{tpu_custom_call.1} parent=1 // pred_check
      _
    $region47: #{tpu_custom_call.1} parent=1 // pred_check_branch
      %157 = sbr.rel (0) target = $region49
    $region48: #{tpu_custom_call.1} parent=1 // pred_region
      %159 = dma.done [#allocation6], 768
    $region49: #{tpu_custom_call.1} parent=1 // pred_fallthru
      _
    // Predicated region
    $region50: #{tpu_custom_call.1} parent=1 // pred_check
      _
    $region51: #{tpu_custom_call.1} parent=1 // pred_check_branch
      %161 = sbr.rel (0) target = $region53
    $region52: #{tpu_custom_call.1} parent=1 // pred_region
      %163 = dma.done [#allocation6], 768
    $region53: #{tpu_custom_call.1} parent=1 // pred_fallthru
      _
    // Predicated region
    $region54: #{tpu_custom_call.1} parent=1 // pred_check
      _
    $region55: #{tpu_custom_call.1} parent=1 // pred_check_branch
      %165 = sbr.rel (0) target = $region57
    $region56: #{tpu_custom_call.1} parent=1 // pred_region
      %167 = dma.done [#allocation9], 256
    $region57: #{tpu_custom_call.1} parent=1 // pred_fallthru
      _
    // Predicated region
    $region58: #{tpu_custom_call.1} parent=1 // pred_check
      _
    $region59: #{tpu_custom_call.1} parent=1 // pred_check_branch
      %169 = sbr.rel (0) target = $region61
    $region60: #{tpu_custom_call.1} parent=1 // pred_region
      %171 = dma.done [#allocation9], 512
    $region61: #{tpu_custom_call.1} parent=1 // pred_fallthru
      _
    // Predicated region
    $region62: #{tpu_custom_call.1} parent=1 // pred_check
      _
    $region63: #{tpu_custom_call.1} parent=1 // pred_check_branch
      %173 = sbr.rel (0) target = $region65
    $region64: #{tpu_custom_call.1} parent=1 // pred_region
      %175 = dma.done [#allocation12], 1024
    $region65: #{tpu_custom_call.1} parent=1 // pred_fallthru
      _
    // Predicated region
    $region66: #{tpu_custom_call.1} parent=1 // pred_check
      _
    $region67: #{tpu_custom_call.1} parent=1 // pred_check_branch
      %177 = sbr.rel (0) target = $region69
    $region68: #{tpu_custom_call.1} parent=1 // pred_region
      %179 = dma.done [#allocation12], 6144
    $region69: #{tpu_custom_call.1} parent=1 // pred_fallthru
      _
    // Predicated region
    $region70: #{tpu_custom_call.1} parent=1 // pred_check
      _
    $region71: #{tpu_custom_call.1} parent=1 // pred_check_branch
      %181 = sbr.rel (0) target = $region73
    $region72: #{tpu_custom_call.1} parent=1 // pred_region
      %183 = dma.done [#allocation15], 2048
    $region73: #{tpu_custom_call.1} parent=1 // pred_fallthru
      _
    // Predicated region
    $region74: #{tpu_custom_call.1} parent=1 // pred_check
      _
    $region75: #{tpu_custom_call.1} parent=1 // pred_check_branch
      %185 = sbr.rel (0) target = $region77
    $region76: #{tpu_custom_call.1} parent=1 // pred_region
      %187 = dma.done [#allocation15], 8192
    $region77: #{tpu_custom_call.1} parent=1 // pred_fallthru
      _
    // Predicated region
    $region78: #{tpu_custom_call.1} parent=1 // pred_check
      _
    $region79: #{tpu_custom_call.1} parent=1 // pred_check_branch
      %189 = sbr.rel (0) target = $region81
    $region80: #{tpu_custom_call.1} parent=1 // pred_region
      %191 = dma.done [#allocation18], 4096
    $region81: #{tpu_custom_call.1} parent=1 // pred_fallthru
      _
    %v193 = vld [vmem:[#allocation2] sm:$0xff]
    %v194 = vld [vmem:[#allocation2 + $0x8] sm:$0xff]
    %v195 = vld [vmem:[#allocation5] sm:$0xff]
    %v196 = vld [vmem:[#allocation5 + $0x8] sm:$0xff]
    %s197 = scalar_lea.vmem [#allocation5], 16
    %v198 = vld [vmem:[%s197] sm:$0xff]
    %v199 = vld [vmem:[%s197 + $0x8] sm:$0xff]
    %s200 = scalar_lea.vmem [#allocation5], 32
    %v201 = vld [vmem:[%s200] sm:$0xff]
    %v202 = vld [vmem:[%s200 + $0x8] sm:$0xff]
    %v203 = vld [vmem:[#allocation7] sm:$0xff]
    %v204 = vld [vmem:[#allocation7 + $0x8] sm:$0xff]
    %s205 = scalar_lea.vmem [#allocation7], 16
    %v206 = vld [vmem:[%s205] sm:$0xff]
    %v207 = vld [vmem:[%s205 + $0x8] sm:$0xff]
    %s208 = scalar_lea.vmem [#allocation7], 32
    %v209 = vld [vmem:[%s208] sm:$0xff]
    %v210 = vld [vmem:[%s208 + $0x8] sm:$0xff]
    %v211 = vld [vmem:[#allocation8] sm:$0xff]
    %v212 = vld [vmem:[#allocation8 + $0x8] sm:$0xff]
    %v213 = vld [vmem:[#allocation10] sm:$0xf]
    %v214 = vld [vmem:[#allocation10 + $0x4] sm:$0xf]
    %v215 = vld [vmem:[#allocation10 + $0x8] sm:$0xf]
    %v216 = vld [vmem:[#allocation10 + $0xc] sm:$0xf]
    %v217 = vld [vmem:[#allocation10 + $0x10] sm:$0xf]
    %v218 = vld [vmem:[#allocation10 + $0x14] sm:$0xf]
    %v219 = vld [vmem:[#allocation10 + $0x18] sm:$0xf]
    %v220 = vld [vmem:[#allocation10 + $0x1c] sm:$0xf]
    %v221 = vld [vmem:[#allocation11] sm:$0xff]
    %v222 = vld [vmem:[#allocation11 + $0x8] sm:$0xff]
    %v223 = vld [vmem:[#allocation11 + $0x10] sm:$0xff]
    %v224 = vld [vmem:[#allocation11 + $0x18] sm:$0xff]
    %v225 = vld [vmem:[#allocation11 + $0x20] sm:$0xff]
    %v226 = vld [vmem:[#allocation11 + $0x28] sm:$0xff]
    %v227 = vld [vmem:[#allocation11 + $0x30] sm:$0xff]
    %v228 = vld [vmem:[#allocation11 + $0x38] sm:$0xff]
    %v229 = vld [vmem:[#allocation13] sm:$0xff]
    %v230 = vld [vmem:[#allocation13 + $0x8] sm:$0xf]
    %v231 = vld [vmem:[#allocation13 + $0xc] sm:$0xff]
    %v232 = vld [vmem:[#allocation13 + $0x14] sm:$0xf]
    %v233 = vld [vmem:[#allocation13 + $0x18] sm:$0xff]
    %v234 = vld [vmem:[#allocation13 + $0x20] sm:$0xf]
    %v235 = vld [vmem:[#allocation13 + $0x24] sm:$0xff]
    %v236 = vld [vmem:[#allocation13 + $0x2c] sm:$0xf]
    %v237 = vld [vmem:[#allocation13 + $0x30] sm:$0xff]
    %v238 = vld [vmem:[#allocation13 + $0x38] sm:$0xf]
    %v239 = vld [vmem:[#allocation13 + $0x3c] sm:$0xff]
    %v240 = vld [vmem:[#allocation13 + $0x44] sm:$0xf]
    %v241 = vld [vmem:[#allocation13 + $0x48] sm:$0xff]
    %v242 = vld [vmem:[#allocation13 + $0x50] sm:$0xf]
    %v243 = vld [vmem:[#allocation13 + $0x54] sm:$0xff]
    %v244 = vld [vmem:[#allocation13 + $0x5c] sm:$0xf]
    %v245 = vld [vmem:[#allocation13 + $0x60] sm:$0xff]
    %v246 = vld [vmem:[#allocation13 + $0x68] sm:$0xf]
    %v247 = vld [vmem:[#allocation13 + $0x6c] sm:$0xff]
    %v248 = vld [vmem:[#allocation13 + $0x74] sm:$0xf]
    %v249 = vld [vmem:[#allocation13 + $0x78] sm:$0xff]
    %v250 = vld [vmem:[#allocation13 + $0x80] sm:$0xf]
    %v251 = vld [vmem:[#allocation13 + $0x84] sm:$0xff]
    %v252 = vld [vmem:[#allocation13 + $0x8c] sm:$0xf]
    %v253 = vld [vmem:[#allocation13 + $0x90] sm:$0xff]
    %v254 = vld [vmem:[#allocation13 + $0x98] sm:$0xf]
    %v255 = vld [vmem:[#allocation13 + $0x9c] sm:$0xff]
    %v256 = vld [vmem:[#allocation13 + $0xa4] sm:$0xf]
    %v257 = vld [vmem:[#allocation13 + $0xa8] sm:$0xff]
    %v258 = vld [vmem:[#allocation13 + $0xb0] sm:$0xf]
    %v259 = vld [vmem:[#allocation13 + $0xb4] sm:$0xff]
    %v260 = vld [vmem:[#allocation13 + $0xbc] sm:$0xf]
    %v261 = vld [vmem:[#allocation14] sm:$0xf]
    %v262 = vld [vmem:[#allocation14 + $0x4] sm:$0xf]
    %v263 = vld [vmem:[#allocation14 + $0x8] sm:$0xf]
    %v264 = vld [vmem:[#allocation14 + $0xc] sm:$0xf]
    %v265 = vld [vmem:[#allocation14 + $0x10] sm:$0xf]
    %v266 = vld [vmem:[#allocation14 + $0x14] sm:$0xf]
    %v267 = vld [vmem:[#allocation14 + $0x18] sm:$0xf]
    %v268 = vld [vmem:[#allocation14 + $0x1c] sm:$0xf]
    %v269 = vld [vmem:[#allocation14 + $0x20] sm:$0xf]
    %v270 = vld [vmem:[#allocation14 + $0x24] sm:$0xf]
    %v271 = vld [vmem:[#allocation14 + $0x28] sm:$0xf]
    %v272 = vld [vmem:[#allocation14 + $0x2c] sm:$0xf]
    %v273 = vld [vmem:[#allocation14 + $0x30] sm:$0xf]
    %v274 = vld [vmem:[#allocation14 + $0x34] sm:$0xf]
    %v275 = vld [vmem:[#allocation14 + $0x38] sm:$0xf]
    %v276 = vld [vmem:[#allocation14 + $0x3c] sm:$0xf]
    %v277 = vld [vmem:[#allocation16] sm:$0xff]
    %v278 = vld [vmem:[#allocation16 + $0x8] sm:$0xff]
    %v279 = vld [vmem:[#allocation16 + $0x10] sm:$0xff]
    %v280 = vld [vmem:[#allocation16 + $0x18] sm:$0xff]
    %v281 = vld [vmem:[#allocation16 + $0x20] sm:$0xff]
    %v282 = vld [vmem:[#allocation16 + $0x28] sm:$0xff]
    %v283 = vld [vmem:[#allocation16 + $0x30] sm:$0xff]
    %v284 = vld [vmem:[#allocation16 + $0x38] sm:$0xff]
    %v285 = vld [vmem:[#allocation16 + $0x40] sm:$0xff]
    %v286 = vld [vmem:[#allocation16 + $0x48] sm:$0xff]
    %v287 = vld [vmem:[#allocation16 + $0x50] sm:$0xff]
    %v288 = vld [vmem:[#allocation16 + $0x58] sm:$0xff]
    %v289 = vld [vmem:[#allocation16 + $0x60] sm:$0xff]
    %v290 = vld [vmem:[#allocation16 + $0x68] sm:$0xff]
    %v291 = vld [vmem:[#allocation16 + $0x70] sm:$0xff]
    %v292 = vld [vmem:[#allocation16 + $0x78] sm:$0xff]
    %v293 = vld [vmem:[#allocation16 + $0x80] sm:$0xff]
    %v294 = vld [vmem:[#allocation16 + $0x88] sm:$0xff]
    %v295 = vld [vmem:[#allocation16 + $0x90] sm:$0xff]
    %v296 = vld [vmem:[#allocation16 + $0x98] sm:$0xff]
    %v297 = vld [vmem:[#allocation16 + $0xa0] sm:$0xff]
    %v298 = vld [vmem:[#allocation16 + $0xa8] sm:$0xff]
    %v299 = vld [vmem:[#allocation16 + $0xb0] sm:$0xff]
    %v300 = vld [vmem:[#allocation16 + $0xb8] sm:$0xff]
    %v301 = vld [vmem:[#allocation16 + $0xc0] sm:$0xff]
    %v302 = vld [vmem:[#allocation16 + $0xc8] sm:$0xff]
    %v303 = vld [vmem:[#allocation16 + $0xd0] sm:$0xff]
    %v304 = vld [vmem:[#allocation16 + $0xd8] sm:$0xff]
    %v305 = vld [vmem:[#allocation16 + $0xe0] sm:$0xff]
    %v306 = vld [vmem:[#allocation16 + $0xe8] sm:$0xff]
    %v307 = vld [vmem:[#allocation16 + $0xf0] sm:$0xff]
    %v308 = vld [vmem:[#allocation16 + $0xf8] sm:$0xff]
    %v309 = vld [vmem:[#allocation17] sm:$0xf]
    %v310 = vld [vmem:[#allocation17 + $0x4] sm:$0xf]
    %v311 = vld [vmem:[#allocation17 + $0x8] sm:$0xf]
    %v312 = vld [vmem:[#allocation17 + $0xc] sm:$0xf]
    %v313 = vld [vmem:[#allocation17 + $0x10] sm:$0xf]
    %v314 = vld [vmem:[#allocation17 + $0x14] sm:$0xf]
    %v315 = vld [vmem:[#allocation17 + $0x18] sm:$0xf]
    %v316 = vld [vmem:[#allocation17 + $0x1c] sm:$0xf]
    %v317 = vld [vmem:[#allocation17 + $0x20] sm:$0xf]
    %v318 = vld [vmem:[#allocation17 + $0x24] sm:$0xf]
    %v319 = vld [vmem:[#allocation17 + $0x28] sm:$0xf]
    %v320 = vld [vmem:[#allocation17 + $0x2c] sm:$0xf]
    %v321 = vld [vmem:[#allocation17 + $0x30] sm:$0xf]
    %v322 = vld [vmem:[#allocation17 + $0x34] sm:$0xf]
    %v323 = vld [vmem:[#allocation17 + $0x38] sm:$0xf]
    %v324 = vld [vmem:[#allocation17 + $0x3c] sm:$0xf]
    %v325 = vld [vmem:[#allocation17 + $0x40] sm:$0xf]
    %v326 = vld [vmem:[#allocation17 + $0x44] sm:$0xf]
    %v327 = vld [vmem:[#allocation17 + $0x48] sm:$0xf]
    %v328 = vld [vmem:[#allocation17 + $0x4c] sm:$0xf]
    %v329 = vld [vmem:[#allocation17 + $0x50] sm:$0xf]
    %v330 = vld [vmem:[#allocation17 + $0x54] sm:$0xf]
    %v331 = vld [vmem:[#allocation17 + $0x58] sm:$0xf]
    %v332 = vld [vmem:[#allocation17 + $0x5c] sm:$0xf]
    %v333 = vld [vmem:[#allocation17 + $0x60] sm:$0xf]
    %v334 = vld [vmem:[#allocation17 + $0x64] sm:$0xf]
    %v335 = vld [vmem:[#allocation17 + $0x68] sm:$0xf]
    %v336 = vld [vmem:[#allocation17 + $0x6c] sm:$0xf]
    %v337 = vld [vmem:[#allocation17 + $0x70] sm:$0xf]
    %v338 = vld [vmem:[#allocation17 + $0x74] sm:$0xf]
    %v339 = vld [vmem:[#allocation17 + $0x78] sm:$0xf]
    %v340 = vld [vmem:[#allocation17 + $0x7c] sm:$0xf]
    %341 = vadd.xlane.f32.xlu0 %v193
    %v342 = vpop.xlane.xlu0 %341
    %343 = vadd.xlane.f32.xlu0 %v194
    %v344 = vpop.xlane.xlu0 %343
    %v345 = vrcp.pop 128.0
    %v346 = vmul.f32 128.0, %v345
    %v347 = vsub.f32 1.0, %v346
    %v348 = vmul.f32 %v345, %v347
    %v349 = vadd.f32 %v345, %v348
    %vm350 = vweird.f32 %v345
    %v351 = vsel %vm350, %v345, %v349
    %v352 = vmul.f32 %v342, %v351
    %v353 = vmul.f32 %v344, %v351
    %v354 = vsub.f32 %v193, %v352
    %v355 = vsub.f32 %v194, %v353
    %v356 = vmul.f32 %v354, %v354
    %v357 = vmul.f32 %v355, %v355
    %358 = vadd.xlane.f32.xlu0 %v356
    %v359 = vpop.xlane.xlu0 %358
    %360 = vadd.xlane.f32.xlu0 %v357
    %v361 = vpop.xlane.xlu0 %360
    %v362 = vmul.f32 %v359, %v351
    %v363 = vmul.f32 %v361, %v351
    %v364 = vadd.f32 %v362, 1e-06
    %v365 = vadd.f32 %v363, 1e-06
    %v366 = vrsqrt.pop %v364
    %v367 = vmul.f32 %v366, %v364
    %v368 = vmul.f32 %v367, %v366
    %v369 = vmul.f32 0.5, %v368
    %v370 = vsub.f32 1.5, %v369
    %v371 = vmul.f32 %v366, %v370
    %vm372 = vweird.f32 %v364
    %vm373 = vweird.f32 %v366
    %vm374 = vmor %vm372, %vm373
    %v375 = vsel %vm374, %v366, %v371
    %v376 = vrsqrt.pop %v365
    %v377 = vmul.f32 %v376, %v365
    %v378 = vmul.f32 %v377, %v376
    %v379 = vmul.f32 0.5, %v378
    %v380 = vsub.f32 1.5, %v379
    %v381 = vmul.f32 %v376, %v380
    %vm382 = vweird.f32 %v365
    %vm383 = vweird.f32 %v376
    %vm384 = vmor %vm382, %vm383
    %v385 = vsel %vm384, %v376, %v381
    %v386 = vmul.f32 %v354, %v375
    %v387 = vmul.f32 %v355, %v385
    %v388 = vpack.c.bf16 %v387, %v386
    %v421 = vunpack.c.l.b16 %v229
    %v422 = vunpack.c.h.b16 %v229
    %v423 = vunpack.c.l.b16 %v230
    %v424 = vunpack.c.l.b16 %v231
    %v425 = vunpack.c.h.b16 %v231
    %v426 = vunpack.c.l.b16 %v232
    %v427 = vunpack.c.l.b16 %v233
    %v428 = vunpack.c.h.b16 %v233
    %v429 = vunpack.c.l.b16 %v234
    %v430 = vunpack.c.l.b16 %v235
    %v431 = vunpack.c.h.b16 %v235
    %v432 = vunpack.c.l.b16 %v236
    %v433 = vunpack.c.l.b16 %v237
    %v434 = vunpack.c.h.b16 %v237
    %v435 = vunpack.c.l.b16 %v238
    %v436 = vunpack.c.l.b16 %v239
    %v437 = vunpack.c.h.b16 %v239
    %v438 = vunpack.c.l.b16 %v240
    %v439 = vunpack.c.l.b16 %v241
    %v440 = vunpack.c.h.b16 %v241
    %v441 = vunpack.c.l.b16 %v242
    %v442 = vunpack.c.l.b16 %v243
    %v443 = vunpack.c.h.b16 %v243
    %v444 = vunpack.c.l.b16 %v244
    %v445 = vunpack.c.l.b16 %v245
    %v446 = vunpack.c.h.b16 %v245
    %v447 = vunpack.c.l.b16 %v246
    %v448 = vunpack.c.l.b16 %v247
    %v449 = vunpack.c.h.b16 %v247
    %v450 = vunpack.c.l.b16 %v248
    %v451 = vunpack.c.l.b16 %v249
    %v452 = vunpack.c.h.b16 %v249
    %v453 = vunpack.c.l.b16 %v250
    %v454 = vunpack.c.l.b16 %v251
    %v455 = vunpack.c.h.b16 %v251
    %v456 = vunpack.c.l.b16 %v252
    %v457 = vunpack.c.l.b16 %v253
    %v458 = vunpack.c.h.b16 %v253
    %v459 = vunpack.c.l.b16 %v254
    %v460 = vunpack.c.l.b16 %v255
    %v461 = vunpack.c.h.b16 %v255
    %v462 = vunpack.c.l.b16 %v256
    %v463 = vunpack.c.l.b16 %v257
    %v464 = vunpack.c.h.b16 %v257
    %v465 = vunpack.c.l.b16 %v258
    %v466 = vunpack.c.l.b16 %v259
    %v467 = vunpack.c.h.b16 %v259
    %v468 = vunpack.c.l.b16 %v260
    %v469 = vpack.c.b16 %v424, %v421
    %v470 = vpack.c.b16 %v425, %v422
    %v471 = vpack.c.b16 %v426, %v423
    %v472 = vpack.c.b16 %v430, %v427
    %v473 = vpack.c.b16 %v431, %v428
    %v474 = vpack.c.b16 %v432, %v429
    %v475 = vpack.c.b16 %v436, %v433
    %v476 = vpack.c.b16 %v437, %v434
    %v477 = vpack.c.b16 %v438, %v435
    %v478 = vpack.c.b16 %v442, %v439
    %v479 = vpack.c.b16 %v443, %v440
    %v480 = vpack.c.b16 %v444, %v441
    %v481 = vpack.c.b16 %v448, %v445
    %v482 = vpack.c.b16 %v449, %v446
    %v483 = vpack.c.b16 %v450, %v447
    %v484 = vpack.c.b16 %v454, %v451
    %v485 = vpack.c.b16 %v455, %v452
    %v486 = vpack.c.b16 %v456, %v453
    %v487 = vpack.c.b16 %v460, %v457
    %v488 = vpack.c.b16 %v461, %v458
    %v489 = vpack.c.b16 %v462, %v459
    %v490 = vpack.c.b16 %v466, %v463
    %v491 = vpack.c.b16 %v467, %v464
    %v492 = vpack.c.b16 %v468, %v465
    %517 = vmatpush.bf16.msra.mxu0 %v490
    %518 = vmatpush.bf16.msra.mxu0 %v487
    %519 = vmatpush.bf16.msra.mxu0 %v484
    %520 = vmatpush.bf16.msra.mxu0 %v481
    %521 = vmatpush.bf16.msra.mxu0 %v478
    %522 = vmatpush.bf16.msra.mxu0 %v475
    %523 = vmatpush.bf16.msra.mxu0 %v472
    %524 = vmatpush.bf16.msra.mxu0 %v469
    %525 = vmatmul.bf16.gmra.mxu0 %v388
    %v526 = vpop.f32.mrf.mxu0
    %v527 = vadd.f32 0.0, %v526
    %v528 = vpop.f32.mrf.mxu0
    %v529 = vadd.f32 0.0, %v528
    %530 = vdwg.mxu0
    %531 = vmatpush.bf16.msra.mxu0 %v491
    %532 = vmatpush.bf16.msra.mxu0 %v488
    %533 = vmatpush.bf16.msra.mxu0 %v485
    %534 = vmatpush.bf16.msra.mxu0 %v482
    %535 = vmatpush.bf16.msra.mxu0 %v479
    %536 = vmatpush.bf16.msra.mxu0 %v476
    %537 = vmatpush.bf16.msra.mxu0 %v473
    %538 = vmatpush.bf16.msra.mxu0 %v470
    %539 = vmatmul.bf16.gmra.mxu0 %v388
    %v540 = vpop.f32.mrf.mxu0
    %v541 = vadd.f32 0.0, %v540
    %v542 = vpop.f32.mrf.mxu0
    %v543 = vadd.f32 0.0, %v542
    %544 = vdwg.mxu0
    %545 = vmatpush.bf16.msra.mxu0 %v492
    %546 = vmatpush.bf16.msra.mxu0 %v489
    %547 = vmatpush.bf16.msra.mxu0 %v486
    %548 = vmatpush.bf16.msra.mxu0 %v483
    %549 = vmatpush.bf16.msra.mxu0 %v480
    %550 = vmatpush.bf16.msra.mxu0 %v477
    %551 = vmatpush.bf16.msra.mxu0 %v474
    %552 = vmatpush.bf16.msra.mxu0 %v471
    %553 = vmatmul.bf16.gmra.mxu0 %v388
    %v554 = vpop.f32.mrf.mxu0
    %v555 = vadd.f32 0.0, %v554
    %v556 = vpop.f32.mrf.mxu0
    %v557 = vadd.f32 0.0, %v556
    %558 = vdwg.mxu0
    %v559 = vmul.f32 %v527, %v195
    %v560 = vmul.f32 %v529, %v196
    %563 = vrot.lane.b32.xlu0 %v527, 112
    %v564 = vpop.permute.xlu0 %563
    %565 = vrot.lane.b32.xlu0 %v529, 112
    %v566 = vpop.permute.xlu0 %565
    %v569 = vmul.f32 %v564, %v198
    %v570 = vmul.f32 %v566, %v199
    %v571 = vadd.f32 %v559, %v569
    %v572 = vadd.f32 %v560, %v570
    %573 = vrot.lane.b32.xlu0 %v527, 16
    %v574 = vpop.permute.xlu0 %573
    %575 = vrot.lane.b32.xlu0 %v529, 16
    %v576 = vpop.permute.xlu0 %575
    %v579 = vmul.f32 %v574, %v201
    %v580 = vmul.f32 %v576, %v202
    %v581 = vadd.f32 %v571, %v579
    %v582 = vadd.f32 %v572, %v580
    %v583 = vmul.f32 %v541, %v203
    %v584 = vmul.f32 %v543, %v204
    %587 = vrot.lane.b32.xlu0 %v541, 112
    %v588 = vpop.permute.xlu0 %587
    %589 = vrot.lane.b32.xlu0 %v543, 112
    %v590 = vpop.permute.xlu0 %589
    %v593 = vmul.f32 %v588, %v206
    %v594 = vmul.f32 %v590, %v207
    %v595 = vadd.f32 %v583, %v593
    %v596 = vadd.f32 %v584, %v594
    %597 = vrot.lane.b32.xlu0 %v541, 16
    %v598 = vpop.permute.xlu0 %597
    %599 = vrot.lane.b32.xlu0 %v543, 16
    %v600 = vpop.permute.xlu0 %599
    %v603 = vmul.f32 %v598, %v209
    %v604 = vmul.f32 %v600, %v210
    %v605 = vadd.f32 %v595, %v603
    %v606 = vadd.f32 %v596, %v604
    %v607 = vpack.c.bf16 %v605, %v605
    %v608 = vpack.c.bf16 %v606, %v606
    %v609 = vpack.c.bf16 %v555, %v555
    %v610 = vpack.c.bf16 %v557, %v557
    %v613 = vunpack.c.l.b16 %v607
    %v614 = vunpack.c.l.b16 %v608
    %v615 = vpack.c.b16 %v614, %v613
    %v617 = vunpack.c.l.bf16 %v615
    %v618 = vunpack.c.h.bf16 %v615
    %v619 = vunpack.c.l.bf16 %v213
    %v620 = vunpack.c.l.bf16 %v214
    %v621 = vunpack.c.l.bf16 %v215
    %v622 = vunpack.c.l.bf16 %v216
    %v623 = vunpack.c.l.bf16 %v217
    %v624 = vunpack.c.l.bf16 %v218
    %v625 = vunpack.c.l.bf16 %v219
    %v626 = vunpack.c.l.bf16 %v220
    %v627 = vmul.f32 %v617, %v619
    %v628 = vmul.f32 %v618, %v620
    %v629 = vmul.f32 %v617, %v621
    %v630 = vmul.f32 %v618, %v622
    %v631 = vmul.f32 %v617, %v623
    %v632 = vmul.f32 %v618, %v624
    %v633 = vmul.f32 %v617, %v625
    %v634 = vmul.f32 %v618, %v626
    %v635 = vpack.c.bf16 %v628, %v627
    %v636 = vpack.c.bf16 %v630, %v629
    %v637 = vpack.c.bf16 %v632, %v631
    %v638 = vpack.c.bf16 %v634, %v633
    %v641 = vunpack.c.l.b16 %v609
    %v642 = vunpack.c.l.b16 %v610
    %v643 = vpack.c.b16 %v642, %v641
    %v645 = vunpack.c.l.bf16 %v643
    %v646 = vunpack.c.h.bf16 %v643
    %v647 = vmul.f32 %v645, %v619
    %v648 = vmul.f32 %v646, %v620
    %v649 = vmul.f32 %v645, %v621
    %v650 = vmul.f32 %v646, %v622
    %v651 = vmul.f32 %v645, %v623
    %v652 = vmul.f32 %v646, %v624
    %v653 = vmul.f32 %v645, %v625
    %v654 = vmul.f32 %v646, %v626
    %v655 = vpack.c.bf16 %v648, %v647
    %v656 = vpack.c.bf16 %v650, %v649
    %v657 = vpack.c.bf16 %v652, %v651
    %v658 = vpack.c.bf16 %v654, %v653
    %v659 = vpack.c.bf16 %v582, %v581
    %660 = vmatpush.bf16.xpose.msra.mxu0 0
    %661 = vmatpush.bf16.xpose.msra.mxu0 0
    %662 = vmatpush.bf16.xpose.msra.mxu0 0
    %663 = vmatpush.bf16.xpose.msra.mxu0 0
    %664 = vmatpush.bf16.xpose.msra.mxu0 %v638
    %665 = vmatpush.bf16.xpose.msra.mxu0 %v637
    %666 = vmatpush.bf16.xpose.msra.mxu0 %v636
    %667 = vmatpush.bf16.xpose.msra.mxu0 %v635
    %668 = vmatmul.bf16.gmra.mxu0 %v659
    %v669 = vpop.f32.mrf.mxu0
    %v670 = vadd.f32 %v211, %v669
    %v671 = vpop.f32.mrf.mxu0
    %v672 = vadd.f32 %v212, %v671
    %673 = vdwg.mxu0
    %vm674 = vcmask 523264
    %v675 = vsel %vm674, %v670, -inf
    %676 = vmax.xlane.f32.xlu0 %v675
    %v677 = vpop.xlane.xlu0 %676
    %v678 = vsel %vm674, %v672, -inf
    %679 = vmax.xlane.f32.xlu0 %v678
    %v680 = vpop.xlane.xlu0 %679
    %v681 = vsub.f32 %v670, %v677
    %v682 = vsub.f32 %v672, %v680
    %v683 = vmul.f32 %v681, 1.442695
    %v684 = vpow.pop %v683
    %v685 = vmul.f32 %v682, 1.442695
    %v686 = vpow.pop %v685
    %v688 = vsel %vm674, %v684, 0
    %v691 = vsel %vm674, %v686, 0
    %693 = vmatpush.msra.mxu0 0.0
    %694 = vmatpush.msra.mxu0 0.0
    %695 = vmatpush.msra.mxu0 0.0
    %696 = vmatpush.msra.mxu0 0.0
    %697 = vmatpush.msra.mxu0 0.0
    %698 = vmatpush.msra.mxu0 0.0
    %699 = vmatpush.msra.mxu0 0.0
    %700 = vmatpush.msra.mxu0 0.0
    %701 = vmatpush.msra.mxu0 %v228
    %702 = vmatpush.msra.mxu0 %v227
    %703 = vmatpush.msra.mxu0 %v226
    %704 = vmatpush.msra.mxu0 %v225
    %705 = vmatpush.msra.mxu0 %v224
    %706 = vmatpush.msra.mxu0 %v223
    %707 = vmatpush.msra.mxu0 %v222
    %708 = vmatpush.msra.mxu0 %v221
    %709 = vmatmul.f32.gmra.mxu0 %v688
    %v710 = vpop.f32.mrf.mxu0
    %v711 = vadd.f32 0.0, %v710
    %712 = vmatmul.f32.gmra.mxu0 %v691
    %v713 = vpop.f32.mrf.mxu0
    %v714 = vadd.f32 0.0, %v713
    %715 = vdwg.mxu0
    %v716 = vrcp.pop %v711
    %v717 = vmul.f32 %v711, %v716
    %v718 = vsub.f32 1.0, %v717
    %v719 = vmul.f32 %v716, %v718
    %v720 = vadd.f32 %v716, %v719
    %vm721 = vweird.f32 %v711
    %vm722 = vweird.f32 %v716
    %vm723 = vmor %vm721, %vm722
    %v724 = vsel %vm723, %v716, %v720
    %v725 = vand.u32 2147483647, %v711
    %vm726 = vcmp.eq.f32.partialorder %v725, 8.507059e+37
    %v727 = vand.u32 %v711, 2147483648
    %v728 = vor.u32 1.1754944e-38, %v727
    %v729 = vsel %vm726, %v728, %v724
    %v730 = vmul.f32 %v684, %v729
    %v731 = vrcp.pop %v714
    %v732 = vmul.f32 %v714, %v731
    %v733 = vsub.f32 1.0, %v732
    %v734 = vmul.f32 %v731, %v733
    %v735 = vadd.f32 %v731, %v734
    %vm736 = vweird.f32 %v714
    %vm737 = vweird.f32 %v731
    %vm738 = vmor %vm736, %vm737
    %v739 = vsel %vm738, %v731, %v735
    %v740 = vand.u32 2147483647, %v714
    %vm741 = vcmp.eq.f32.partialorder %v740, 8.507059e+37
    %v742 = vand.u32 %v714, 2147483648
    %v743 = vor.u32 1.1754944e-38, %v742
    %v744 = vsel %vm741, %v743, %v739
    %v745 = vmul.f32 %v686, %v744
    %v746 = vpack.c.bf16 %v745, %v730
    %v748 = vsel %vm674, %v746, 0
    %750 = vmatpush.bf16.msra.mxu0 0
    %751 = vmatpush.bf16.msra.mxu0 0
    %752 = vmatpush.bf16.msra.mxu0 0
    %753 = vmatpush.bf16.msra.mxu0 0
    %754 = vmatpush.bf16.msra.mxu0 %v658
    %755 = vmatpush.bf16.msra.mxu0 %v657
    %756 = vmatpush.bf16.msra.mxu0 %v656
    %757 = vmatpush.bf16.msra.mxu0 %v655
    %758 = vmatmul.bf16.gmra.mxu0 %v748
    %v759 = vpop.f32.mrf.mxu0
    %v760 = vadd.f32 0.0, %v759
    %v761 = vpop.f32.mrf.mxu0
    %v762 = vadd.f32 0.0, %v761
    %763 = vdwg.mxu0
    %v764 = vpack.c.bf16 %v762, %v760
    %v781 = vunpack.c.l.b16 %v261
    %v782 = vunpack.c.l.b16 %v262
    %v783 = vunpack.c.l.b16 %v263
    %v784 = vunpack.c.l.b16 %v264
    %v785 = vunpack.c.l.b16 %v265
    %v786 = vunpack.c.l.b16 %v266
    %v787 = vunpack.c.l.b16 %v267
    %v788 = vunpack.c.l.b16 %v268
    %v789 = vunpack.c.l.b16 %v269
    %v790 = vunpack.c.l.b16 %v270
    %v791 = vunpack.c.l.b16 %v271
    %v792 = vunpack.c.l.b16 %v272
    %v793 = vunpack.c.l.b16 %v273
    %v794 = vunpack.c.l.b16 %v274
    %v795 = vunpack.c.l.b16 %v275
    %v796 = vunpack.c.l.b16 %v276
    %v797 = vpack.c.b16 %v782, %v781
    %v798 = vpack.c.b16 %v784, %v783
    %v799 = vpack.c.b16 %v786, %v785
    %v800 = vpack.c.b16 %v788, %v787
    %v801 = vpack.c.b16 %v790, %v789
    %v802 = vpack.c.b16 %v792, %v791
    %v803 = vpack.c.b16 %v794, %v793
    %v804 = vpack.c.b16 %v796, %v795
    %813 = vmatpush.bf16.msra.mxu0 %v804
    %814 = vmatpush.bf16.msra.mxu0 %v803
    %815 = vmatpush.bf16.msra.mxu0 %v802
    %816 = vmatpush.bf16.msra.mxu0 %v801
    %817 = vmatpush.bf16.msra.mxu0 %v800
    %818 = vmatpush.bf16.msra.mxu0 %v799
    %819 = vmatpush.bf16.msra.mxu0 %v798
    %820 = vmatpush.bf16.msra.mxu0 %v797
    %821 = vmatmul.bf16.gmra.mxu0 %v764
    %v822 = vpop.f32.mrf.mxu0
    %v823 = vadd.f32 0.0, %v822
    %v824 = vpop.f32.mrf.mxu0
    %v825 = vadd.f32 0.0, %v824
    %826 = vdwg.mxu0
    %v827 = vadd.f32 %v193, %v823
    %v828 = vadd.f32 %v194, %v825
    %829 = vadd.xlane.f32.xlu0 %v827
    %v830 = vpop.xlane.xlu0 %829
    %831 = vadd.xlane.f32.xlu0 %v828
    %v832 = vpop.xlane.xlu0 %831
    %v833 = vmul.f32 %v830, %v351
    %v834 = vmul.f32 %v832, %v351
    %v835 = vsub.f32 %v827, %v833
    %v836 = vsub.f32 %v828, %v834
    %v837 = vmul.f32 %v835, %v835
    %v838 = vmul.f32 %v836, %v836
    %839 = vadd.xlane.f32.xlu0 %v837
    %v840 = vpop.xlane.xlu0 %839
    %841 = vadd.xlane.f32.xlu0 %v838
    %v842 = vpop.xlane.xlu0 %841
    %v843 = vmul.f32 %v840, %v351
    %v844 = vmul.f32 %v842, %v351
    %v845 = vadd.f32 %v843, 1e-06
    %v846 = vadd.f32 %v844, 1e-06
    %v847 = vrsqrt.pop %v845
    %v848 = vmul.f32 %v847, %v845
    %v849 = vmul.f32 %v848, %v847
    %v850 = vmul.f32 0.5, %v849
    %v851 = vsub.f32 1.5, %v850
    %v852 = vmul.f32 %v847, %v851
    %vm853 = vweird.f32 %v845
    %vm854 = vweird.f32 %v847
    %vm855 = vmor %vm853, %vm854
    %v856 = vsel %vm855, %v847, %v852
    %v857 = vrsqrt.pop %v846
    %v858 = vmul.f32 %v857, %v846
    %v859 = vmul.f32 %v858, %v857
    %v860 = vmul.f32 0.5, %v859
    %v861 = vsub.f32 1.5, %v860
    %v862 = vmul.f32 %v857, %v861
    %vm863 = vweird.f32 %v846
    %vm864 = vweird.f32 %v857
    %vm865 = vmor %vm863, %vm864
    %v866 = vsel %vm865, %v857, %v862
    %v867 = vmul.f32 %v835, %v856
    %v868 = vmul.f32 %v836, %v866
    %v869 = vpack.c.bf16 %v868, %v867
    %v902 = vunpack.c.l.b16 %v277
    %v903 = vunpack.c.h.b16 %v277
    %v904 = vunpack.c.l.b16 %v278
    %v905 = vunpack.c.h.b16 %v278
    %v906 = vunpack.c.l.b16 %v279
    %v907 = vunpack.c.h.b16 %v279
    %v908 = vunpack.c.l.b16 %v280
    %v909 = vunpack.c.h.b16 %v280
    %v910 = vunpack.c.l.b16 %v281
    %v911 = vunpack.c.h.b16 %v281
    %v912 = vunpack.c.l.b16 %v282
    %v913 = vunpack.c.h.b16 %v282
    %v914 = vunpack.c.l.b16 %v283
    %v915 = vunpack.c.h.b16 %v283
    %v916 = vunpack.c.l.b16 %v284
    %v917 = vunpack.c.h.b16 %v284
    %v918 = vunpack.c.l.b16 %v285
    %v919 = vunpack.c.h.b16 %v285
    %v920 = vunpack.c.l.b16 %v286
    %v921 = vunpack.c.h.b16 %v286
    %v922 = vunpack.c.l.b16 %v287
    %v923 = vunpack.c.h.b16 %v287
    %v924 = vunpack.c.l.b16 %v288
    %v925 = vunpack.c.h.b16 %v288
    %v926 = vunpack.c.l.b16 %v289
    %v927 = vunpack.c.h.b16 %v289
    %v928 = vunpack.c.l.b16 %v290
    %v929 = vunpack.c.h.b16 %v290
    %v930 = vunpack.c.l.b16 %v291
    %v931 = vunpack.c.h.b16 %v291
    %v932 = vunpack.c.l.b16 %v292
    %v933 = vunpack.c.h.b16 %v292
    %v934 = vunpack.c.l.b16 %v293
    %v935 = vunpack.c.h.b16 %v293
    %v936 = vunpack.c.l.b16 %v294
    %v937 = vunpack.c.h.b16 %v294
    %v938 = vunpack.c.l.b16 %v295
    %v939 = vunpack.c.h.b16 %v295
    %v940 = vunpack.c.l.b16 %v296
    %v941 = vunpack.c.h.b16 %v296
    %v942 = vunpack.c.l.b16 %v297
    %v943 = vunpack.c.h.b16 %v297
    %v944 = vunpack.c.l.b16 %v298
    %v945 = vunpack.c.h.b16 %v298
    %v946 = vunpack.c.l.b16 %v299
    %v947 = vunpack.c.h.b16 %v299
    %v948 = vunpack.c.l.b16 %v300
    %v949 = vunpack.c.h.b16 %v300
    %v950 = vunpack.c.l.b16 %v301
    %v951 = vunpack.c.h.b16 %v301
    %v952 = vunpack.c.l.b16 %v302
    %v953 = vunpack.c.h.b16 %v302
    %v954 = vunpack.c.l.b16 %v303
    %v955 = vunpack.c.h.b16 %v303
    %v956 = vunpack.c.l.b16 %v304
    %v957 = vunpack.c.h.b16 %v304
    %v958 = vunpack.c.l.b16 %v305
    %v959 = vunpack.c.h.b16 %v305
    %v960 = vunpack.c.l.b16 %v306
    %v961 = vunpack.c.h.b16 %v306
    %v962 = vunpack.c.l.b16 %v307
    %v963 = vunpack.c.h.b16 %v307
    %v964 = vunpack.c.l.b16 %v308
    %v965 = vunpack.c.h.b16 %v308
    %v966 = vpack.c.b16 %v906, %v902
    %v967 = vpack.c.b16 %v907, %v903
    %v968 = vpack.c.b16 %v908, %v904
    %v969 = vpack.c.b16 %v909, %v905
    %v970 = vpack.c.b16 %v914, %v910
    %v971 = vpack.c.b16 %v915, %v911
    %v972 = vpack.c.b16 %v916, %v912
    %v973 = vpack.c.b16 %v917, %v913
    %v974 = vpack.c.b16 %v922, %v918
    %v975 = vpack.c.b16 %v923, %v919
    %v976 = vpack.c.b16 %v924, %v920
    %v977 = vpack.c.b16 %v925, %v921
    %v978 = vpack.c.b16 %v930, %v926
    %v979 = vpack.c.b16 %v931, %v927
    %v980 = vpack.c.b16 %v932, %v928
    %v981 = vpack.c.b16 %v933, %v929
    %v982 = vpack.c.b16 %v938, %v934
    %v983 = vpack.c.b16 %v939, %v935
    %v984 = vpack.c.b16 %v940, %v936
    %v985 = vpack.c.b16 %v941, %v937
    %v986 = vpack.c.b16 %v946, %v942
    %v987 = vpack.c.b16 %v947, %v943
    %v988 = vpack.c.b16 %v948, %v944
    %v989 = vpack.c.b16 %v949, %v945
    %v990 = vpack.c.b16 %v954, %v950
    %v991 = vpack.c.b16 %v955, %v951
    %v992 = vpack.c.b16 %v956, %v952
    %v993 = vpack.c.b16 %v957, %v953
    %v994 = vpack.c.b16 %v962, %v958
    %v995 = vpack.c.b16 %v963, %v959
    %v996 = vpack.c.b16 %v964, %v960
    %v997 = vpack.c.b16 %v965, %v961
    %1030 = vmatpush.bf16.msra.mxu0 %v994
    %1031 = vmatpush.bf16.msra.mxu0 %v990
    %1032 = vmatpush.bf16.msra.mxu0 %v986
    %1033 = vmatpush.bf16.msra.mxu0 %v982
    %1034 = vmatpush.bf16.msra.mxu0 %v978
    %1035 = vmatpush.bf16.msra.mxu0 %v974
    %1036 = vmatpush.bf16.msra.mxu0 %v970
    %1037 = vmatpush.bf16.msra.mxu0 %v966
    %1038 = vmatmul.bf16.gmra.mxu0 %v869
    %v1039 = vpop.f32.mrf.mxu0
    %v1040 = vadd.f32 0.0, %v1039
    %v1041 = vpop.f32.mrf.mxu0
    %v1042 = vadd.f32 0.0, %v1041
    %1043 = vdwg.mxu0
    %1044 = vmatpush.bf16.msra.mxu0 %v995
    %1045 = vmatpush.bf16.msra.mxu0 %v991
    %1046 = vmatpush.bf16.msra.mxu0 %v987
    %1047 = vmatpush.bf16.msra.mxu0 %v983
    %1048 = vmatpush.bf16.msra.mxu0 %v979
    %1049 = vmatpush.bf16.msra.mxu0 %v975
    %1050 = vmatpush.bf16.msra.mxu0 %v971
    %1051 = vmatpush.bf16.msra.mxu0 %v967
    %1052 = vmatmul.bf16.gmra.mxu0 %v869
    %v1053 = vpop.f32.mrf.mxu0
    %v1054 = vadd.f32 0.0, %v1053
    %v1055 = vpop.f32.mrf.mxu0
    %v1056 = vadd.f32 0.0, %v1055
    %1057 = vdwg.mxu0
    %1058 = vmatpush.bf16.msra.mxu0 %v996
    %1059 = vmatpush.bf16.msra.mxu0 %v992
    %1060 = vmatpush.bf16.msra.mxu0 %v988
    %1061 = vmatpush.bf16.msra.mxu0 %v984
    %1062 = vmatpush.bf16.msra.mxu0 %v980
    %1063 = vmatpush.bf16.msra.mxu0 %v976
    %1064 = vmatpush.bf16.msra.mxu0 %v972
    %1065 = vmatpush.bf16.msra.mxu0 %v968
    %1066 = vmatmul.bf16.gmra.mxu0 %v869
    %v1067 = vpop.f32.mrf.mxu0
    %v1068 = vadd.f32 0.0, %v1067
    %v1069 = vpop.f32.mrf.mxu0
    %v1070 = vadd.f32 0.0, %v1069
    %1071 = vdwg.mxu0
    %1072 = vmatpush.bf16.msra.mxu0 %v997
    %1073 = vmatpush.bf16.msra.mxu0 %v993
    %1074 = vmatpush.bf16.msra.mxu0 %v989
    %1075 = vmatpush.bf16.msra.mxu0 %v985
    %1076 = vmatpush.bf16.msra.mxu0 %v981
    %1077 = vmatpush.bf16.msra.mxu0 %v977
    %1078 = vmatpush.bf16.msra.mxu0 %v973
    %1079 = vmatpush.bf16.msra.mxu0 %v969
    %1080 = vmatmul.bf16.gmra.mxu0 %v869
    %v1081 = vpop.f32.mrf.mxu0
    %v1082 = vadd.f32 0.0, %v1081
    %v1083 = vpop.f32.mrf.mxu0
    %v1084 = vadd.f32 0.0, %v1083
    %1085 = vdwg.mxu0
    %v1086 = vxor.u32 %v1040, 2147483648
    %v1087 = vxor.u32 %v1054, 2147483648
    %v1088 = vxor.u32 %v1042, 2147483648
    %v1089 = vxor.u32 %v1056, 2147483648
    %v1090 = vmul.f32 %v1086, 1.442695
    %v1091 = vpow.pop %v1090
    %v1092 = vmul.f32 %v1087, 1.442695
    %v1093 = vpow.pop %v1092
    %v1094 = vmul.f32 %v1088, 1.442695
    %v1095 = vpow.pop %v1094
    %v1096 = vmul.f32 %v1089, 1.442695
    %v1097 = vpow.pop %v1096
    %v1098 = vadd.f32 %v1091, 1.0
    %v1099 = vadd.f32 %v1093, 1.0
    %v1100 = vadd.f32 %v1095, 1.0
    %v1101 = vadd.f32 %v1097, 1.0
    %v1102 = vrcp.pop %v1098
    %v1103 = vmul.f32 %v1098, %v1102
    %v1104 = vsub.f32 1.0, %v1103
    %v1105 = vmul.f32 %v1102, %v1104
    %v1106 = vadd.f32 %v1102, %v1105
    %vm1107 = vweird.f32 %v1098
    %vm1108 = vweird.f32 %v1102
    %vm1109 = vmor %vm1107, %vm1108
    %v1110 = vsel %vm1109, %v1102, %v1106
    %v1111 = vand.u32 2147483647, %v1098
    %vm1112 = vcmp.eq.f32.partialorder %v1111, 8.507059e+37
    %v1113 = vand.u32 %v1098, 2147483648
    %v1114 = vor.u32 1.1754944e-38, %v1113
    %v1115 = vsel %vm1112, %v1114, %v1110
    %v1116 = vmul.f32 1.0, %v1115
    %v1117 = vrcp.pop %v1099
    %v1118 = vmul.f32 %v1099, %v1117
    %v1119 = vsub.f32 1.0, %v1118
    %v1120 = vmul.f32 %v1117, %v1119
    %v1121 = vadd.f32 %v1117, %v1120
    %vm1122 = vweird.f32 %v1099
    %vm1123 = vweird.f32 %v1117
    %vm1124 = vmor %vm1122, %vm1123
    %v1125 = vsel %vm1124, %v1117, %v1121
    %v1126 = vand.u32 2147483647, %v1099
    %vm1127 = vcmp.eq.f32.partialorder %v1126, 8.507059e+37
    %v1128 = vand.u32 %v1099, 2147483648
    %v1129 = vor.u32 1.1754944e-38, %v1128
    %v1130 = vsel %vm1127, %v1129, %v1125
    %v1131 = vmul.f32 1.0, %v1130
    %v1132 = vrcp.pop %v1100
    %v1133 = vmul.f32 %v1100, %v1132
    %v1134 = vsub.f32 1.0, %v1133
    %v1135 = vmul.f32 %v1132, %v1134
    %v1136 = vadd.f32 %v1132, %v1135
    %vm1137 = vweird.f32 %v1100
    %vm1138 = vweird.f32 %v1132
    %vm1139 = vmor %vm1137, %vm1138
    %v1140 = vsel %vm1139, %v1132, %v1136
    %v1141 = vand.u32 2147483647, %v1100
    %vm1142 = vcmp.eq.f32.partialorder %v1141, 8.507059e+37
    %v1143 = vand.u32 %v1100, 2147483648
    %v1144 = vor.u32 1.1754944e-38, %v1143
    %v1145 = vsel %vm1142, %v1144, %v1140
    %v1146 = vmul.f32 1.0, %v1145
    %v1147 = vrcp.pop %v1101
    %v1148 = vmul.f32 %v1101, %v1147
    %v1149 = vsub.f32 1.0, %v1148
    %v1150 = vmul.f32 %v1147, %v1149
    %v1151 = vadd.f32 %v1147, %v1150
    %vm1152 = vweird.f32 %v1101
    %vm1153 = vweird.f32 %v1147
    %vm1154 = vmor %vm1152, %vm1153
    %v1155 = vsel %vm1154, %v1147, %v1151
    %v1156 = vand.u32 2147483647, %v1101
    %vm1157 = vcmp.eq.f32.partialorder %v1156, 8.507059e+37
    %v1158 = vand.u32 %v1101, 2147483648
    %v1159 = vor.u32 1.1754944e-38, %v1158
    %v1160 = vsel %vm1157, %v1159, %v1155
    %v1161 = vmul.f32 1.0, %v1160
    %v1162 = vmul.f32 %v1040, %v1116
    %v1163 = vmul.f32 %v1054, %v1131
    %v1164 = vmul.f32 %v1042, %v1146
    %v1165 = vmul.f32 %v1056, %v1161
    %v1166 = vmul.f32 %v1162, %v1068
    %v1167 = vmul.f32 %v1163, %v1082
    %v1168 = vmul.f32 %v1164, %v1070
    %v1169 = vmul.f32 %v1165, %v1084
    %v1170 = vpack.c.bf16 %v1168, %v1166
    %v1171 = vpack.c.bf16 %v1169, %v1167
    %v1204 = vunpack.c.l.b16 %v309
    %v1205 = vunpack.c.l.b16 %v310
    %v1206 = vunpack.c.l.b16 %v311
    %v1207 = vunpack.c.l.b16 %v312
    %v1208 = vunpack.c.l.b16 %v313
    %v1209 = vunpack.c.l.b16 %v314
    %v1210 = vunpack.c.l.b16 %v315
    %v1211 = vunpack.c.l.b16 %v316
    %v1212 = vunpack.c.l.b16 %v317
    %v1213 = vunpack.c.l.b16 %v318
    %v1214 = vunpack.c.l.b16 %v319
    %v1215 = vunpack.c.l.b16 %v320
    %v1216 = vunpack.c.l.b16 %v321
    %v1217 = vunpack.c.l.b16 %v322
    %v1218 = vunpack.c.l.b16 %v323
    %v1219 = vunpack.c.l.b16 %v324
    %v1220 = vunpack.c.l.b16 %v325
    %v1221 = vunpack.c.l.b16 %v326
    %v1222 = vunpack.c.l.b16 %v327
    %v1223 = vunpack.c.l.b16 %v328
    %v1224 = vunpack.c.l.b16 %v329
    %v1225 = vunpack.c.l.b16 %v330
    %v1226 = vunpack.c.l.b16 %v331
    %v1227 = vunpack.c.l.b16 %v332
    %v1228 = vunpack.c.l.b16 %v333
    %v1229 = vunpack.c.l.b16 %v334
    %v1230 = vunpack.c.l.b16 %v335
    %v1231 = vunpack.c.l.b16 %v336
    %v1232 = vunpack.c.l.b16 %v337
    %v1233 = vunpack.c.l.b16 %v338
    %v1234 = vunpack.c.l.b16 %v339
    %v1235 = vunpack.c.l.b16 %v340
    %v1236 = vpack.c.b16 %v1205, %v1204
    %v1237 = vpack.c.b16 %v1207, %v1206
    %v1238 = vpack.c.b16 %v1209, %v1208
    %v1239 = vpack.c.b16 %v1211, %v1210
    %v1240 = vpack.c.b16 %v1213, %v1212
    %v1241 = vpack.c.b16 %v1215, %v1214
    %v1242 = vpack.c.b16 %v1217, %v1216
    %v1243 = vpack.c.b16 %v1219, %v1218
    %v1244 = vpack.c.b16 %v1221, %v1220
    %v1245 = vpack.c.b16 %v1223, %v1222
    %v1246 = vpack.c.b16 %v1225, %v1224
    %v1247 = vpack.c.b16 %v1227, %v1226
    %v1248 = vpack.c.b16 %v1229, %v1228
    %v1249 = vpack.c.b16 %v1231, %v1230
    %v1250 = vpack.c.b16 %v1233, %v1232
    %v1251 = vpack.c.b16 %v1235, %v1234
    %1268 = vmatpush.bf16.msra.mxu0 %v1243
    %1269 = vmatpush.bf16.msra.mxu0 %v1242
    %1270 = vmatpush.bf16.msra.mxu0 %v1241
    %1271 = vmatpush.bf16.msra.mxu0 %v1240
    %1272 = vmatpush.bf16.msra.mxu0 %v1239
    %1273 = vmatpush.bf16.msra.mxu0 %v1238
    %1274 = vmatpush.bf16.msra.mxu0 %v1237
    %1275 = vmatpush.bf16.msra.mxu0 %v1236
    %1276 = vmatmul.bf16.gmra.mxu0 %v1170
    %v1277 = vpop.f32.mrf.mxu0
    %v1278 = vadd.f32 0.0, %v1277
    %v1279 = vpop.f32.mrf.mxu0
    %v1280 = vadd.f32 0.0, %v1279
    %1281 = vdwg.mxu0
    %1282 = vmatpush.bf16.msra.mxu0 %v1251
    %1283 = vmatpush.bf16.msra.mxu0 %v1250
    %1284 = vmatpush.bf16.msra.mxu0 %v1249
    %1285 = vmatpush.bf16.msra.mxu0 %v1248
    %1286 = vmatpush.bf16.msra.mxu0 %v1247
    %1287 = vmatpush.bf16.msra.mxu0 %v1246
    %1288 = vmatpush.bf16.msra.mxu0 %v1245
    %1289 = vmatpush.bf16.msra.mxu0 %v1244
    %1290 = vmatmul.bf16.gmra.mxu0 %v1171
    %v1291 = vpop.f32.mrf.mxu0
    %v1292 = vadd.f32 %v1278, %v1291
    %v1293 = vpop.f32.mrf.mxu0
    %v1294 = vadd.f32 %v1280, %v1293
    %1295 = vdwg.mxu0
    %v1296 = vadd.f32 %v827, %v1292
    %v1297 = vadd.f32 %v828, %v1294
    %s1298 = scalar_lea.vmem [#allocation13], 192
    %v1299 = vld [vmem:[%s1298] sm:$0xff]
    %v1300 = vld [vmem:[%s1298 + $0x8] sm:$0xf]
    %v1301 = vld [vmem:[%s1298 + $0xc] sm:$0xff]
    %v1302 = vld [vmem:[%s1298 + $0x14] sm:$0xf]
    %v1303 = vld [vmem:[%s1298 + $0x18] sm:$0xff]
    %v1304 = vld [vmem:[%s1298 + $0x20] sm:$0xf]
    %v1305 = vld [vmem:[%s1298 + $0x24] sm:$0xff]
    %v1306 = vld [vmem:[%s1298 + $0x2c] sm:$0xf]
    %v1307 = vld [vmem:[%s1298 + $0x30] sm:$0xff]
    %v1308 = vld [vmem:[%s1298 + $0x38] sm:$0xf]
    %v1309 = vld [vmem:[%s1298 + $0x3c] sm:$0xff]
    %v1310 = vld [vmem:[%s1298 + $0x44] sm:$0xf]
    %v1311 = vld [vmem:[%s1298 + $0x48] sm:$0xff]
    %v1312 = vld [vmem:[%s1298 + $0x50] sm:$0xf]
    %v1313 = vld [vmem:[%s1298 + $0x54] sm:$0xff]
    %v1314 = vld [vmem:[%s1298 + $0x5c] sm:$0xf]
    %v1315 = vld [vmem:[%s1298 + $0x60] sm:$0xff]
    %v1316 = vld [vmem:[%s1298 + $0x68] sm:$0xf]
    %v1317 = vld [vmem:[%s1298 + $0x6c] sm:$0xff]
    %v1318 = vld [vmem:[%s1298 + $0x74] sm:$0xf]
    %v1319 = vld [vmem:[%s1298 + $0x78] sm:$0xff]
    %v1320 = vld [vmem:[%s1298 + $0x80] sm:$0xf]
    %v1321 = vld [vmem:[%s1298 + $0x84] sm:$0xff]
    %v1322 = vld [vmem:[%s1298 + $0x8c] sm:$0xf]
    %v1323 = vld [vmem:[%s1298 + $0x90] sm:$0xff]
    %v1324 = vld [vmem:[%s1298 + $0x98] sm:$0xf]
    %v1325 = vld [vmem:[%s1298 + $0x9c] sm:$0xff]
    %v1326 = vld [vmem:[%s1298 + $0xa4] sm:$0xf]
    %v1327 = vld [vmem:[%s1298 + $0xa8] sm:$0xff]
    %v1328 = vld [vmem:[%s1298 + $0xb0] sm:$0xf]
    %v1329 = vld [vmem:[%s1298 + $0xb4] sm:$0xff]
    %v1330 = vld [vmem:[%s1298 + $0xbc] sm:$0xf]
    %s1331 = scalar_lea.vmem [#allocation14], 64
    %v1332 = vld [vmem:[%s1331] sm:$0xf]
    %v1333 = vld [vmem:[%s1331 + $0x4] sm:$0xf]
    %v1334 = vld [vmem:[%s1331 + $0x8] sm:$0xf]
    %v1335 = vld [vmem:[%s1331 + $0xc] sm:$0xf]
    %v1336 = vld [vmem:[%s1331 + $0x10] sm:$0xf]
    %v1337 = vld [vmem:[%s1331 + $0x14] sm:$0xf]
    %v1338 = vld [vmem:[%s1331 + $0x18] sm:$0xf]
    %v1339 = vld [vmem:[%s1331 + $0x1c] sm:$0xf]
    %v1340 = vld [vmem:[%s1331 + $0x20] sm:$0xf]
    %v1341 = vld [vmem:[%s1331 + $0x24] sm:$0xf]
    %v1342 = vld [vmem:[%s1331 + $0x28] sm:$0xf]
    %v1343 = vld [vmem:[%s1331 + $0x2c] sm:$0xf]
    %v1344 = vld [vmem:[%s1331 + $0x30] sm:$0xf]
    %v1345 = vld [vmem:[%s1331 + $0x34] sm:$0xf]
    %v1346 = vld [vmem:[%s1331 + $0x38] sm:$0xf]
    %v1347 = vld [vmem:[%s1331 + $0x3c] sm:$0xf]
    %s1348 = scalar_lea.vmem [#allocation16], 256
    %v1349 = vld [vmem:[%s1348] sm:$0xff]
    %v1350 = vld [vmem:[%s1348 + $0x8] sm:$0xff]
    %v1351 = vld [vmem:[%s1348 + $0x10] sm:$0xff]
    %v1352 = vld [vmem:[%s1348 + $0x18] sm:$0xff]
    %v1353 = vld [vmem:[%s1348 + $0x20] sm:$0xff]
    %v1354 = vld [vmem:[%s1348 + $0x28] sm:$0xff]
    %v1355 = vld [vmem:[%s1348 + $0x30] sm:$0xff]
    %v1356 = vld [vmem:[%s1348 + $0x38] sm:$0xff]
    %v1357 = vld [vmem:[%s1348 + $0x40] sm:$0xff]
    %v1358 = vld [vmem:[%s1348 + $0x48] sm:$0xff]
    %v1359 = vld [vmem:[%s1348 + $0x50] sm:$0xff]
    %v1360 = vld [vmem:[%s1348 + $0x58] sm:$0xff]
    %v1361 = vld [vmem:[%s1348 + $0x60] sm:$0xff]
    %v1362 = vld [vmem:[%s1348 + $0x68] sm:$0xff]
    %v1363 = vld [vmem:[%s1348 + $0x70] sm:$0xff]
    %v1364 = vld [vmem:[%s1348 + $0x78] sm:$0xff]
    %v1365 = vld [vmem:[%s1348 + $0x80] sm:$0xff]
    %v1366 = vld [vmem:[%s1348 + $0x88] sm:$0xff]
    %v1367 = vld [vmem:[%s1348 + $0x90] sm:$0xff]
    %v1368 = vld [vmem:[%s1348 + $0x98] sm:$0xff]
    %v1369 = vld [vmem:[%s1348 + $0xa0] sm:$0xff]
    %v1370 = vld [vmem:[%s1348 + $0xa8] sm:$0xff]
    %v1371 = vld [vmem:[%s1348 + $0xb0] sm:$0xff]
    %v1372 = vld [vmem:[%s1348 + $0xb8] sm:$0xff]
    %v1373 = vld [vmem:[%s1348 + $0xc0] sm:$0xff]
    %v1374 = vld [vmem:[%s1348 + $0xc8] sm:$0xff]
    %v1375 = vld [vmem:[%s1348 + $0xd0] sm:$0xff]
    %v1376 = vld [vmem:[%s1348 + $0xd8] sm:$0xff]
    %v1377 = vld [vmem:[%s1348 + $0xe0] sm:$0xff]
    %v1378 = vld [vmem:[%s1348 + $0xe8] sm:$0xff]
    %v1379 = vld [vmem:[%s1348 + $0xf0] sm:$0xff]
    %v1380 = vld [vmem:[%s1348 + $0xf8] sm:$0xff]
    %s1381 = scalar_lea.vmem [#allocation17], 128
    %v1382 = vld [vmem:[%s1381] sm:$0xf]
    %v1383 = vld [vmem:[%s1381 + $0x4] sm:$0xf]
    %v1384 = vld [vmem:[%s1381 + $0x8] sm:$0xf]
    %v1385 = vld [vmem:[%s1381 + $0xc] sm:$0xf]
    %v1386 = vld [vmem:[%s1381 + $0x10] sm:$0xf]
    %v1387 = vld [vmem:[%s1381 + $0x14] sm:$0xf]
    %v1388 = vld [vmem:[%s1381 + $0x18] sm:$0xf]
    %v1389 = vld [vmem:[%s1381 + $0x1c] sm:$0xf]
    %v1390 = vld [vmem:[%s1381 + $0x20] sm:$0xf]
    %v1391 = vld [vmem:[%s1381 + $0x24] sm:$0xf]
    %v1392 = vld [vmem:[%s1381 + $0x28] sm:$0xf]
    %v1393 = vld [vmem:[%s1381 + $0x2c] sm:$0xf]
    %v1394 = vld [vmem:[%s1381 + $0x30] sm:$0xf]
    %v1395 = vld [vmem:[%s1381 + $0x34] sm:$0xf]
    %v1396 = vld [vmem:[%s1381 + $0x38] sm:$0xf]
    %v1397 = vld [vmem:[%s1381 + $0x3c] sm:$0xf]
    %v1398 = vld [vmem:[%s1381 + $0x40] sm:$0xf]
    %v1399 = vld [vmem:[%s1381 + $0x44] sm:$0xf]
    %v1400 = vld [vmem:[%s1381 + $0x48] sm:$0xf]
    %v1401 = vld [vmem:[%s1381 + $0x4c] sm:$0xf]
    %v1402 = vld [vmem:[%s1381 + $0x50] sm:$0xf]
    %v1403 = vld [vmem:[%s1381 + $0x54] sm:$0xf]
    %v1404 = vld [vmem:[%s1381 + $0x58] sm:$0xf]
    %v1405 = vld [vmem:[%s1381 + $0x5c] sm:$0xf]
    %v1406 = vld [vmem:[%s1381 + $0x60] sm:$0xf]
    %v1407 = vld [vmem:[%s1381 + $0x64] sm:$0xf]
    %v1408 = vld [vmem:[%s1381 + $0x68] sm:$0xf]
    %v1409 = vld [vmem:[%s1381 + $0x6c] sm:$0xf]
    %v1410 = vld [vmem:[%s1381 + $0x70] sm:$0xf]
    %v1411 = vld [vmem:[%s1381 + $0x74] sm:$0xf]
    %v1412 = vld [vmem:[%s1381 + $0x78] sm:$0xf]
    %v1413 = vld [vmem:[%s1381 + $0x7c] sm:$0xf]
    %1414 = vadd.xlane.f32.xlu0 %v1296
    %v1415 = vpop.xlane.xlu0 %1414
    %1416 = vadd.xlane.f32.xlu0 %v1297
    %v1417 = vpop.xlane.xlu0 %1416
    %v1418 = vmul.f32 %v1415, %v351
    %v1419 = vmul.f32 %v1417, %v351
    %v1420 = vsub.f32 %v1296, %v1418
    %v1421 = vsub.f32 %v1297, %v1419
    %v1422 = vmul.f32 %v1420, %v1420
    %v1423 = vmul.f32 %v1421, %v1421
    %1424 = vadd.xlane.f32.xlu0 %v1422
    %v1425 = vpop.xlane.xlu0 %1424
    %1426 = vadd.xlane.f32.xlu0 %v1423
    %v1427 = vpop.xlane.xlu0 %1426
    %v1428 = vmul.f32 %v1425, %v351
    %v1429 = vmul.f32 %v1427, %v351
    %v1430 = vadd.f32 %v1428, 1e-06
    %v1431 = vadd.f32 %v1429, 1e-06
    %v1432 = vrsqrt.pop %v1430
    %v1433 = vmul.f32 %v1432, %v1430
    %v1434 = vmul.f32 %v1433, %v1432
    %v1435 = vmul.f32 0.5, %v1434
    %v1436 = vsub.f32 1.5, %v1435
    %v1437 = vmul.f32 %v1432, %v1436
    %vm1438 = vweird.f32 %v1430
    %vm1439 = vweird.f32 %v1432
    %vm1440 = vmor %vm1438, %vm1439
    %v1441 = vsel %vm1440, %v1432, %v1437
    %v1442 = vrsqrt.pop %v1431
    %v1443 = vmul.f32 %v1442, %v1431
    %v1444 = vmul.f32 %v1443, %v1442
    %v1445 = vmul.f32 0.5, %v1444
    %v1446 = vsub.f32 1.5, %v1445
    %v1447 = vmul.f32 %v1442, %v1446
    %vm1448 = vweird.f32 %v1431
    %vm1449 = vweird.f32 %v1442
    %vm1450 = vmor %vm1448, %vm1449
    %v1451 = vsel %vm1450, %v1442, %v1447
    %v1452 = vmul.f32 %v1420, %v1441
    %v1453 = vmul.f32 %v1421, %v1451
    %v1454 = vpack.c.bf16 %v1453, %v1452
    %v1487 = vunpack.c.l.b16 %v1299
    %v1488 = vunpack.c.h.b16 %v1299
    %v1489 = vunpack.c.l.b16 %v1300
    %v1490 = vunpack.c.l.b16 %v1301
    %v1491 = vunpack.c.h.b16 %v1301
    %v1492 = vunpack.c.l.b16 %v1302
    %v1493 = vunpack.c.l.b16 %v1303
    %v1494 = vunpack.c.h.b16 %v1303
    %v1495 = vunpack.c.l.b16 %v1304
    %v1496 = vunpack.c.l.b16 %v1305
    %v1497 = vunpack.c.h.b16 %v1305
    %v1498 = vunpack.c.l.b16 %v1306
    %v1499 = vunpack.c.l.b16 %v1307
    %v1500 = vunpack.c.h.b16 %v1307
    %v1501 = vunpack.c.l.b16 %v1308
    %v1502 = vunpack.c.l.b16 %v1309
    %v1503 = vunpack.c.h.b16 %v1309
    %v1504 = vunpack.c.l.b16 %v1310
    %v1505 = vunpack.c.l.b16 %v1311
    %v1506 = vunpack.c.h.b16 %v1311
    %v1507 = vunpack.c.l.b16 %v1312
    %v1508 = vunpack.c.l.b16 %v1313
    %v1509 = vunpack.c.h.b16 %v1313
    %v1510 = vunpack.c.l.b16 %v1314
    %v1511 = vunpack.c.l.b16 %v1315
    %v1512 = vunpack.c.h.b16 %v1315
    %v1513 = vunpack.c.l.b16 %v1316
    %v1514 = vunpack.c.l.b16 %v1317
    %v1515 = vunpack.c.h.b16 %v1317
    %v1516 = vunpack.c.l.b16 %v1318
    %v1517 = vunpack.c.l.b16 %v1319
    %v1518 = vunpack.c.h.b16 %v1319
    %v1519 = vunpack.c.l.b16 %v1320
    %v1520 = vunpack.c.l.b16 %v1321
    %v1521 = vunpack.c.h.b16 %v1321
    %v1522 = vunpack.c.l.b16 %v1322
    %v1523 = vunpack.c.l.b16 %v1323
    %v1524 = vunpack.c.h.b16 %v1323
    %v1525 = vunpack.c.l.b16 %v1324
    %v1526 = vunpack.c.l.b16 %v1325
    %v1527 = vunpack.c.h.b16 %v1325
    %v1528 = vunpack.c.l.b16 %v1326
    %v1529 = vunpack.c.l.b16 %v1327
    %v1530 = vunpack.c.h.b16 %v1327
    %v1531 = vunpack.c.l.b16 %v1328
    %v1532 = vunpack.c.l.b16 %v1329
    %v1533 = vunpack.c.h.b16 %v1329
    %v1534 = vunpack.c.l.b16 %v1330
    %v1535 = vpack.c.b16 %v1490, %v1487
    %v1536 = vpack.c.b16 %v1491, %v1488
    %v1537 = vpack.c.b16 %v1492, %v1489
    %v1538 = vpack.c.b16 %v1496, %v1493
    %v1539 = vpack.c.b16 %v1497, %v1494
    %v1540 = vpack.c.b16 %v1498, %v1495
    %v1541 = vpack.c.b16 %v1502, %v1499
    %v1542 = vpack.c.b16 %v1503, %v1500
    %v1543 = vpack.c.b16 %v1504, %v1501
    %v1544 = vpack.c.b16 %v1508, %v1505
    %v1545 = vpack.c.b16 %v1509, %v1506
    %v1546 = vpack.c.b16 %v1510, %v1507
    %v1547 = vpack.c.b16 %v1514, %v1511
    %v1548 = vpack.c.b16 %v1515, %v1512
    %v1549 = vpack.c.b16 %v1516, %v1513
    %v1550 = vpack.c.b16 %v1520, %v1517
    %v1551 = vpack.c.b16 %v1521, %v1518
    %v1552 = vpack.c.b16 %v1522, %v1519
    %v1553 = vpack.c.b16 %v1526, %v1523
    %v1554 = vpack.c.b16 %v1527, %v1524
    %v1555 = vpack.c.b16 %v1528, %v1525
    %v1556 = vpack.c.b16 %v1532, %v1529
    %v1557 = vpack.c.b16 %v1533, %v1530
    %v1558 = vpack.c.b16 %v1534, %v1531
    %1583 = vmatpush.bf16.msra.mxu0 %v1556
    %1584 = vmatpush.bf16.msra.mxu0 %v1553
    %1585 = vmatpush.bf16.msra.mxu0 %v1550
    %1586 = vmatpush.bf16.msra.mxu0 %v1547
    %1587 = vmatpush.bf16.msra.mxu0 %v1544
    %1588 = vmatpush.bf16.msra.mxu0 %v1541
    %1589 = vmatpush.bf16.msra.mxu0 %v1538
    %1590 = vmatpush.bf16.msra.mxu0 %v1535
    %1591 = vmatmul.bf16.gmra.mxu0 %v1454
    %v1592 = vpop.f32.mrf.mxu0
    %v1593 = vadd.f32 0.0, %v1592
    %v1594 = vpop.f32.mrf.mxu0
    %v1595 = vadd.f32 0.0, %v1594
    %1596 = vdwg.mxu0
    %1597 = vmatpush.bf16.msra.mxu0 %v1557
    %1598 = vmatpush.bf16.msra.mxu0 %v1554
    %1599 = vmatpush.bf16.msra.mxu0 %v1551
    %1600 = vmatpush.bf16.msra.mxu0 %v1548
    %1601 = vmatpush.bf16.msra.mxu0 %v1545
    %1602 = vmatpush.bf16.msra.mxu0 %v1542
    %1603 = vmatpush.bf16.msra.mxu0 %v1539
    %1604 = vmatpush.bf16.msra.mxu0 %v1536
    %1605 = vmatmul.bf16.gmra.mxu0 %v1454
    %v1606 = vpop.f32.mrf.mxu0
    %v1607 = vadd.f32 0.0, %v1606
    %v1608 = vpop.f32.mrf.mxu0
    %v1609 = vadd.f32 0.0, %v1608
    %1610 = vdwg.mxu0
    %1611 = vmatpush.bf16.msra.mxu0 %v1558
    %1612 = vmatpush.bf16.msra.mxu0 %v1555
    %1613 = vmatpush.bf16.msra.mxu0 %v1552
    %1614 = vmatpush.bf16.msra.mxu0 %v1549
    %1615 = vmatpush.bf16.msra.mxu0 %v1546
    %1616 = vmatpush.bf16.msra.mxu0 %v1543
    %1617 = vmatpush.bf16.msra.mxu0 %v1540
    %1618 = vmatpush.bf16.msra.mxu0 %v1537
    %1619 = vmatmul.bf16.gmra.mxu0 %v1454
    %v1620 = vpop.f32.mrf.mxu0
    %v1621 = vadd.f32 0.0, %v1620
    %v1622 = vpop.f32.mrf.mxu0
    %v1623 = vadd.f32 0.0, %v1622
    %1624 = vdwg.mxu0
    %v1625 = vmul.f32 %v1593, %v195
    %v1626 = vmul.f32 %v1595, %v196
    %1629 = vrot.lane.b32.xlu0 %v1593, 112
    %v1630 = vpop.permute.xlu0 %1629
    %1631 = vrot.lane.b32.xlu0 %v1595, 112
    %v1632 = vpop.permute.xlu0 %1631
    %v1635 = vmul.f32 %v1630, %v198
    %v1636 = vmul.f32 %v1632, %v199
    %v1637 = vadd.f32 %v1625, %v1635
    %v1638 = vadd.f32 %v1626, %v1636
    %1639 = vrot.lane.b32.xlu0 %v1593, 16
    %v1640 = vpop.permute.xlu0 %1639
    %1641 = vrot.lane.b32.xlu0 %v1595, 16
    %v1642 = vpop.permute.xlu0 %1641
    %v1645 = vmul.f32 %v1640, %v201
    %v1646 = vmul.f32 %v1642, %v202
    %v1647 = vadd.f32 %v1637, %v1645
    %v1648 = vadd.f32 %v1638, %v1646
    %v1649 = vmul.f32 %v1607, %v203
    %v1650 = vmul.f32 %v1609, %v204
    %1653 = vrot.lane.b32.xlu0 %v1607, 112
    %v1654 = vpop.permute.xlu0 %1653
    %1655 = vrot.lane.b32.xlu0 %v1609, 112
    %v1656 = vpop.permute.xlu0 %1655
    %v1659 = vmul.f32 %v1654, %v206
    %v1660 = vmul.f32 %v1656, %v207
    %v1661 = vadd.f32 %v1649, %v1659
    %v1662 = vadd.f32 %v1650, %v1660
    %1663 = vrot.lane.b32.xlu0 %v1607, 16
    %v1664 = vpop.permute.xlu0 %1663
    %1665 = vrot.lane.b32.xlu0 %v1609, 16
    %v1666 = vpop.permute.xlu0 %1665
    %v1669 = vmul.f32 %v1664, %v209
    %v1670 = vmul.f32 %v1666, %v210
    %v1671 = vadd.f32 %v1661, %v1669
    %v1672 = vadd.f32 %v1662, %v1670
    %v1673 = vpack.c.bf16 %v1671, %v1671
    %v1674 = vpack.c.bf16 %v1672, %v1672
    %v1675 = vpack.c.bf16 %v1621, %v1621
    %v1676 = vpack.c.bf16 %v1623, %v1623
    %v1679 = vunpack.c.l.b16 %v1673
    %v1680 = vunpack.c.l.b16 %v1674
    %v1681 = vpack.c.b16 %v1680, %v1679
    %v1683 = vunpack.c.l.bf16 %v1681
    %v1684 = vunpack.c.h.bf16 %v1681
    %v1685 = vmul.f32 %v1683, %v619
    %v1686 = vmul.f32 %v1684, %v620
    %v1687 = vmul.f32 %v1683, %v621
    %v1688 = vmul.f32 %v1684, %v622
    %v1689 = vmul.f32 %v1683, %v623
    %v1690 = vmul.f32 %v1684, %v624
    %v1691 = vmul.f32 %v1683, %v625
    %v1692 = vmul.f32 %v1684, %v626
    %v1693 = vpack.c.bf16 %v1686, %v1685
    %v1694 = vpack.c.bf16 %v1688, %v1687
    %v1695 = vpack.c.bf16 %v1690, %v1689
    %v1696 = vpack.c.bf16 %v1692, %v1691
    %v1699 = vunpack.c.l.b16 %v1675
    %v1700 = vunpack.c.l.b16 %v1676
    %v1701 = vpack.c.b16 %v1700, %v1699
    %v1703 = vunpack.c.l.bf16 %v1701
    %v1704 = vunpack.c.h.bf16 %v1701
    %v1705 = vmul.f32 %v1703, %v619
    %v1706 = vmul.f32 %v1704, %v620
    %v1707 = vmul.f32 %v1703, %v621
    %v1708 = vmul.f32 %v1704, %v622
    %v1709 = vmul.f32 %v1703, %v623
    %v1710 = vmul.f32 %v1704, %v624
    %v1711 = vmul.f32 %v1703, %v625
    %v1712 = vmul.f32 %v1704, %v626
    %v1713 = vpack.c.bf16 %v1706, %v1705
    %v1714 = vpack.c.bf16 %v1708, %v1707
    %v1715 = vpack.c.bf16 %v1710, %v1709
    %v1716 = vpack.c.bf16 %v1712, %v1711
    %v1717 = vpack.c.bf16 %v1648, %v1647
    %1718 = vmatpush.bf16.xpose.msra.mxu0 0
    %1719 = vmatpush.bf16.xpose.msra.mxu0 0
    %1720 = vmatpush.bf16.xpose.msra.mxu0 0
    %1721 = vmatpush.bf16.xpose.msra.mxu0 0
    %1722 = vmatpush.bf16.xpose.msra.mxu0 %v1696
    %1723 = vmatpush.bf16.xpose.msra.mxu0 %v1695
    %1724 = vmatpush.bf16.xpose.msra.mxu0 %v1694
    %1725 = vmatpush.bf16.xpose.msra.mxu0 %v1693
    %1726 = vmatmul.bf16.gmra.mxu0 %v1717
    %v1727 = vpop.f32.mrf.mxu0
    %v1728 = vadd.f32 %v211, %v1727
    %v1729 = vpop.f32.mrf.mxu0
    %v1730 = vadd.f32 %v212, %v1729
    %1731 = vdwg.mxu0
    %v1732 = vsel %vm674, %v1728, -inf
    %1733 = vmax.xlane.f32.xlu0 %v1732
    %v1734 = vpop.xlane.xlu0 %1733
    %v1735 = vsel %vm674, %v1730, -inf
    %1736 = vmax.xlane.f32.xlu0 %v1735
    %v1737 = vpop.xlane.xlu0 %1736
    %v1738 = vsub.f32 %v1728, %v1734
    %v1739 = vsub.f32 %v1730, %v1737
    %v1740 = vmul.f32 %v1738, 1.442695
    %v1741 = vpow.pop %v1740
    %v1742 = vmul.f32 %v1739, 1.442695
    %v1743 = vpow.pop %v1742
    %v1745 = vsel %vm674, %v1741, 0
    %v1748 = vsel %vm674, %v1743, 0
    %1750 = vmatpush.msra.mxu0 0.0
    %1751 = vmatpush.msra.mxu0 0.0
    %1752 = vmatpush.msra.mxu0 0.0
    %1753 = vmatpush.msra.mxu0 0.0
    %1754 = vmatpush.msra.mxu0 0.0
    %1755 = vmatpush.msra.mxu0 0.0
    %1756 = vmatpush.msra.mxu0 0.0
    %1757 = vmatpush.msra.mxu0 0.0
    %1758 = vmatpush.msra.mxu0 %v228
    %1759 = vmatpush.msra.mxu0 %v227
    %1760 = vmatpush.msra.mxu0 %v226
    %1761 = vmatpush.msra.mxu0 %v225
    %1762 = vmatpush.msra.mxu0 %v224
    %1763 = vmatpush.msra.mxu0 %v223
    %1764 = vmatpush.msra.mxu0 %v222
    %1765 = vmatpush.msra.mxu0 %v221
    %1766 = vmatmul.f32.gmra.mxu0 %v1745
    %v1767 = vpop.f32.mrf.mxu0
    %v1768 = vadd.f32 0.0, %v1767
    %1769 = vmatmul.f32.gmra.mxu0 %v1748
    %v1770 = vpop.f32.mrf.mxu0
    %v1771 = vadd.f32 0.0, %v1770
    %1772 = vdwg.mxu0
    %v1773 = vrcp.pop %v1768
    %v1774 = vmul.f32 %v1768, %v1773
    %v1775 = vsub.f32 1.0, %v1774
    %v1776 = vmul.f32 %v1773, %v1775
    %v1777 = vadd.f32 %v1773, %v1776
    %vm1778 = vweird.f32 %v1768
    %vm1779 = vweird.f32 %v1773
    %vm1780 = vmor %vm1778, %vm1779
    %v1781 = vsel %vm1780, %v1773, %v1777
    %v1782 = vand.u32 2147483647, %v1768
    %vm1783 = vcmp.eq.f32.partialorder %v1782, 8.507059e+37
    %v1784 = vand.u32 %v1768, 2147483648
    %v1785 = vor.u32 1.1754944e-38, %v1784
    %v1786 = vsel %vm1783, %v1785, %v1781
    %v1787 = vmul.f32 %v1741, %v1786
    %v1788 = vrcp.pop %v1771
    %v1789 = vmul.f32 %v1771, %v1788
    %v1790 = vsub.f32 1.0, %v1789
    %v1791 = vmul.f32 %v1788, %v1790
    %v1792 = vadd.f32 %v1788, %v1791
    %vm1793 = vweird.f32 %v1771
    %vm1794 = vweird.f32 %v1788
    %vm1795 = vmor %vm1793, %vm1794
    %v1796 = vsel %vm1795, %v1788, %v1792
    %v1797 = vand.u32 2147483647, %v1771
    %vm1798 = vcmp.eq.f32.partialorder %v1797, 8.507059e+37
    %v1799 = vand.u32 %v1771, 2147483648
    %v1800 = vor.u32 1.1754944e-38, %v1799
    %v1801 = vsel %vm1798, %v1800, %v1796
    %v1802 = vmul.f32 %v1743, %v1801
    %v1803 = vpack.c.bf16 %v1802, %v1787
    %v1805 = vsel %vm674, %v1803, 0
    %1807 = vmatpush.bf16.msra.mxu0 0
    %1808 = vmatpush.bf16.msra.mxu0 0
    %1809 = vmatpush.bf16.msra.mxu0 0
    %1810 = vmatpush.bf16.msra.mxu0 0
    %1811 = vmatpush.bf16.msra.mxu0 %v1716
    %1812 = vmatpush.bf16.msra.mxu0 %v1715
    %1813 = vmatpush.bf16.msra.mxu0 %v1714
    %1814 = vmatpush.bf16.msra.mxu0 %v1713
    %1815 = vmatmul.bf16.gmra.mxu0 %v1805
    %v1816 = vpop.f32.mrf.mxu0
    %v1817 = vadd.f32 0.0, %v1816
    %v1818 = vpop.f32.mrf.mxu0
    %v1819 = vadd.f32 0.0, %v1818
    %1820 = vdwg.mxu0
    %v1821 = vpack.c.bf16 %v1819, %v1817
    %v1838 = vunpack.c.l.b16 %v1332
    %v1839 = vunpack.c.l.b16 %v1333
    %v1840 = vunpack.c.l.b16 %v1334
    %v1841 = vunpack.c.l.b16 %v1335
    %v1842 = vunpack.c.l.b16 %v1336
    %v1843 = vunpack.c.l.b16 %v1337
    %v1844 = vunpack.c.l.b16 %v1338
    %v1845 = vunpack.c.l.b16 %v1339
    %v1846 = vunpack.c.l.b16 %v1340
    %v1847 = vunpack.c.l.b16 %v1341
    %v1848 = vunpack.c.l.b16 %v1342
    %v1849 = vunpack.c.l.b16 %v1343
    %v1850 = vunpack.c.l.b16 %v1344
    %v1851 = vunpack.c.l.b16 %v1345
    %v1852 = vunpack.c.l.b16 %v1346
    %v1853 = vunpack.c.l.b16 %v1347
    %v1854 = vpack.c.b16 %v1839, %v1838
    %v1855 = vpack.c.b16 %v1841, %v1840
    %v1856 = vpack.c.b16 %v1843, %v1842
    %v1857 = vpack.c.b16 %v1845, %v1844
    %v1858 = vpack.c.b16 %v1847, %v1846
    %v1859 = vpack.c.b16 %v1849, %v1848
    %v1860 = vpack.c.b16 %v1851, %v1850
    %v1861 = vpack.c.b16 %v1853, %v1852
    %1870 = vmatpush.bf16.msra.mxu0 %v1861
    %1871 = vmatpush.bf16.msra.mxu0 %v1860
    %1872 = vmatpush.bf16.msra.mxu0 %v1859
    %1873 = vmatpush.bf16.msra.mxu0 %v1858
    %1874 = vmatpush.bf16.msra.mxu0 %v1857
    %1875 = vmatpush.bf16.msra.mxu0 %v1856
    %1876 = vmatpush.bf16.msra.mxu0 %v1855
    %1877 = vmatpush.bf16.msra.mxu0 %v1854
    %1878 = vmatmul.bf16.gmra.mxu0 %v1821
    %v1879 = vpop.f32.mrf.mxu0
    %v1880 = vadd.f32 0.0, %v1879
    %v1881 = vpop.f32.mrf.mxu0
    %v1882 = vadd.f32 0.0, %v1881
    %1883 = vdwg.mxu0
    %v1884 = vadd.f32 %v1296, %v1880
    %v1885 = vadd.f32 %v1297, %v1882
    %1886 = vadd.xlane.f32.xlu0 %v1884
    %v1887 = vpop.xlane.xlu0 %1886
    %1888 = vadd.xlane.f32.xlu0 %v1885
    %v1889 = vpop.xlane.xlu0 %1888
    %v1890 = vmul.f32 %v1887, %v351
    %v1891 = vmul.f32 %v1889, %v351
    %v1892 = vsub.f32 %v1884, %v1890
    %v1893 = vsub.f32 %v1885, %v1891
    %v1894 = vmul.f32 %v1892, %v1892
    %v1895 = vmul.f32 %v1893, %v1893
    %1896 = vadd.xlane.f32.xlu0 %v1894
    %v1897 = vpop.xlane.xlu0 %1896
    %1898 = vadd.xlane.f32.xlu0 %v1895
    %v1899 = vpop.xlane.xlu0 %1898
    %v1900 = vmul.f32 %v1897, %v351
    %v1901 = vmul.f32 %v1899, %v351
    %v1902 = vadd.f32 %v1900, 1e-06
    %v1903 = vadd.f32 %v1901, 1e-06
    %v1904 = vrsqrt.pop %v1902
    %v1905 = vmul.f32 %v1904, %v1902
    %v1906 = vmul.f32 %v1905, %v1904
    %v1907 = vmul.f32 0.5, %v1906
    %v1908 = vsub.f32 1.5, %v1907
    %v1909 = vmul.f32 %v1904, %v1908
    %vm1910 = vweird.f32 %v1902
    %vm1911 = vweird.f32 %v1904
    %vm1912 = vmor %vm1910, %vm1911
    %v1913 = vsel %vm1912, %v1904, %v1909
    %v1914 = vrsqrt.pop %v1903
    %v1915 = vmul.f32 %v1914, %v1903
    %v1916 = vmul.f32 %v1915, %v1914
    %v1917 = vmul.f32 0.5, %v1916
    %v1918 = vsub.f32 1.5, %v1917
    %v1919 = vmul.f32 %v1914, %v1918
    %vm1920 = vweird.f32 %v1903
    %vm1921 = vweird.f32 %v1914
    %vm1922 = vmor %vm1920, %vm1921
    %v1923 = vsel %vm1922, %v1914, %v1919
    %v1924 = vmul.f32 %v1892, %v1913
    %v1925 = vmul.f32 %v1893, %v1923
    %v1926 = vpack.c.bf16 %v1925, %v1924
    %v1959 = vunpack.c.l.b16 %v1349
    %v1960 = vunpack.c.h.b16 %v1349
    %v1961 = vunpack.c.l.b16 %v1350
    %v1962 = vunpack.c.h.b16 %v1350
    %v1963 = vunpack.c.l.b16 %v1351
    %v1964 = vunpack.c.h.b16 %v1351
    %v1965 = vunpack.c.l.b16 %v1352
    %v1966 = vunpack.c.h.b16 %v1352
    %v1967 = vunpack.c.l.b16 %v1353
    %v1968 = vunpack.c.h.b16 %v1353
    %v1969 = vunpack.c.l.b16 %v1354
    %v1970 = vunpack.c.h.b16 %v1354
    %v1971 = vunpack.c.l.b16 %v1355
    %v1972 = vunpack.c.h.b16 %v1355
    %v1973 = vunpack.c.l.b16 %v1356
    %v1974 = vunpack.c.h.b16 %v1356
    %v1975 = vunpack.c.l.b16 %v1357
    %v1976 = vunpack.c.h.b16 %v1357
    %v1977 = vunpack.c.l.b16 %v1358
    %v1978 = vunpack.c.h.b16 %v1358
    %v1979 = vunpack.c.l.b16 %v1359
    %v1980 = vunpack.c.h.b16 %v1359
    %v1981 = vunpack.c.l.b16 %v1360
    %v1982 = vunpack.c.h.b16 %v1360
    %v1983 = vunpack.c.l.b16 %v1361
    %v1984 = vunpack.c.h.b16 %v1361
    %v1985 = vunpack.c.l.b16 %v1362
    %v1986 = vunpack.c.h.b16 %v1362
    %v1987 = vunpack.c.l.b16 %v1363
    %v1988 = vunpack.c.h.b16 %v1363
    %v1989 = vunpack.c.l.b16 %v1364
    %v1990 = vunpack.c.h.b16 %v1364
    %v1991 = vunpack.c.l.b16 %v1365
    %v1992 = vunpack.c.h.b16 %v1365
    %v1993 = vunpack.c.l.b16 %v1366
    %v1994 = vunpack.c.h.b16 %v1366
    %v1995 = vunpack.c.l.b16 %v1367
    %v1996 = vunpack.c.h.b16 %v1367
    %v1997 = vunpack.c.l.b16 %v1368
    %v1998 = vunpack.c.h.b16 %v1368
    %v1999 = vunpack.c.l.b16 %v1369
    %v2000 = vunpack.c.h.b16 %v1369
    %v2001 = vunpack.c.l.b16 %v1370
    %v2002 = vunpack.c.h.b16 %v1370
    %v2003 = vunpack.c.l.b16 %v1371
    %v2004 = vunpack.c.h.b16 %v1371
    %v2005 = vunpack.c.l.b16 %v1372
    %v2006 = vunpack.c.h.b16 %v1372
    %v2007 = vunpack.c.l.b16 %v1373
    %v2008 = vunpack.c.h.b16 %v1373
    %v2009 = vunpack.c.l.b16 %v1374
    %v2010 = vunpack.c.h.b16 %v1374
    %v2011 = vunpack.c.l.b16 %v1375
    %v2012 = vunpack.c.h.b16 %v1375
    %v2013 = vunpack.c.l.b16 %v1376
    %v2014 = vunpack.c.h.b16 %v1376
    %v2015 = vunpack.c.l.b16 %v1377
    %v2016 = vunpack.c.h.b16 %v1377
    %v2017 = vunpack.c.l.b16 %v1378
    %v2018 = vunpack.c.h.b16 %v1378
    %v2019 = vunpack.c.l.b16 %v1379
    %v2020 = vunpack.c.h.b16 %v1379
    %v2021 = vunpack.c.l.b16 %v1380
    %v2022 = vunpack.c.h.b16 %v1380
    %v2023 = vpack.c.b16 %v1963, %v1959
    %v2024 = vpack.c.b16 %v1964, %v1960
    %v2025 = vpack.c.b16 %v1965, %v1961
    %v2026 = vpack.c.b16 %v1966, %v1962
    %v2027 = vpack.c.b16 %v1971, %v1967
    %v2028 = vpack.c.b16 %v1972, %v1968
    %v2029 = vpack.c.b16 %v1973, %v1969
    %v2030 = vpack.c.b16 %v1974, %v1970
    %v2031 = vpack.c.b16 %v1979, %v1975
    %v2032 = vpack.c.b16 %v1980, %v1976
    %v2033 = vpack.c.b16 %v1981, %v1977
    %v2034 = vpack.c.b16 %v1982, %v1978
    %v2035 = vpack.c.b16 %v1987, %v1983
    %v2036 = vpack.c.b16 %v1988, %v1984
    %v2037 = vpack.c.b16 %v1989, %v1985
    %v2038 = vpack.c.b16 %v1990, %v1986
    %v2039 = vpack.c.b16 %v1995, %v1991
    %v2040 = vpack.c.b16 %v1996, %v1992
    %v2041 = vpack.c.b16 %v1997, %v1993
    %v2042 = vpack.c.b16 %v1998, %v1994
    %v2043 = vpack.c.b16 %v2003, %v1999
    %v2044 = vpack.c.b16 %v2004, %v2000
    %v2045 = vpack.c.b16 %v2005, %v2001
    %v2046 = vpack.c.b16 %v2006, %v2002
    %v2047 = vpack.c.b16 %v2011, %v2007
    %v2048 = vpack.c.b16 %v2012, %v2008
    %v2049 = vpack.c.b16 %v2013, %v2009
    %v2050 = vpack.c.b16 %v2014, %v2010
    %v2051 = vpack.c.b16 %v2019, %v2015
    %v2052 = vpack.c.b16 %v2020, %v2016
    %v2053 = vpack.c.b16 %v2021, %v2017
    %v2054 = vpack.c.b16 %v2022, %v2018
    %2087 = vmatpush.bf16.msra.mxu0 %v2051
    %2088 = vmatpush.bf16.msra.mxu0 %v2047
    %2089 = vmatpush.bf16.msra.mxu0 %v2043
    %2090 = vmatpush.bf16.msra.mxu0 %v2039
    %2091 = vmatpush.bf16.msra.mxu0 %v2035
    %2092 = vmatpush.bf16.msra.mxu0 %v2031
    %2093 = vmatpush.bf16.msra.mxu0 %v2027
    %2094 = vmatpush.bf16.msra.mxu0 %v2023
    %2095 = vmatmul.bf16.gmra.mxu0 %v1926
    %v2096 = vpop.f32.mrf.mxu0
    %v2097 = vadd.f32 0.0, %v2096
    %v2098 = vpop.f32.mrf.mxu0
    %v2099 = vadd.f32 0.0, %v2098
    %2100 = vdwg.mxu0
    %2101 = vmatpush.bf16.msra.mxu0 %v2052
    %2102 = vmatpush.bf16.msra.mxu0 %v2048
    %2103 = vmatpush.bf16.msra.mxu0 %v2044
    %2104 = vmatpush.bf16.msra.mxu0 %v2040
    %2105 = vmatpush.bf16.msra.mxu0 %v2036
    %2106 = vmatpush.bf16.msra.mxu0 %v2032
    %2107 = vmatpush.bf16.msra.mxu0 %v2028
    %2108 = vmatpush.bf16.msra.mxu0 %v2024
    %2109 = vmatmul.bf16.gmra.mxu0 %v1926
    %v2110 = vpop.f32.mrf.mxu0
    %v2111 = vadd.f32 0.0, %v2110
    %v2112 = vpop.f32.mrf.mxu0
    %v2113 = vadd.f32 0.0, %v2112
    %2114 = vdwg.mxu0
    %2115 = vmatpush.bf16.msra.mxu0 %v2053
    %2116 = vmatpush.bf16.msra.mxu0 %v2049
    %2117 = vmatpush.bf16.msra.mxu0 %v2045
    %2118 = vmatpush.bf16.msra.mxu0 %v2041
    %2119 = vmatpush.bf16.msra.mxu0 %v2037
    %2120 = vmatpush.bf16.msra.mxu0 %v2033
    %2121 = vmatpush.bf16.msra.mxu0 %v2029
    %2122 = vmatpush.bf16.msra.mxu0 %v2025
    %2123 = vmatmul.bf16.gmra.mxu0 %v1926
    %v2124 = vpop.f32.mrf.mxu0
    %v2125 = vadd.f32 0.0, %v2124
    %v2126 = vpop.f32.mrf.mxu0
    %v2127 = vadd.f32 0.0, %v2126
    %2128 = vdwg.mxu0
    %2129 = vmatpush.bf16.msra.mxu0 %v2054
    %2130 = vmatpush.bf16.msra.mxu0 %v2050
    %2131 = vmatpush.bf16.msra.mxu0 %v2046
    %2132 = vmatpush.bf16.msra.mxu0 %v2042
    %2133 = vmatpush.bf16.msra.mxu0 %v2038
    %2134 = vmatpush.bf16.msra.mxu0 %v2034
    %2135 = vmatpush.bf16.msra.mxu0 %v2030
    %2136 = vmatpush.bf16.msra.mxu0 %v2026
    %2137 = vmatmul.bf16.gmra.mxu0 %v1926
    %v2138 = vpop.f32.mrf.mxu0
    %v2139 = vadd.f32 0.0, %v2138
    %v2140 = vpop.f32.mrf.mxu0
    %v2141 = vadd.f32 0.0, %v2140
    %2142 = vdwg.mxu0
    %v2143 = vxor.u32 %v2097, 2147483648
    %v2144 = vxor.u32 %v2111, 2147483648
    %v2145 = vxor.u32 %v2099, 2147483648
    %v2146 = vxor.u32 %v2113, 2147483648
    %v2147 = vmul.f32 %v2143, 1.442695
    %v2148 = vpow.pop %v2147
    %v2149 = vmul.f32 %v2144, 1.442695
    %v2150 = vpow.pop %v2149
    %v2151 = vmul.f32 %v2145, 1.442695
    %v2152 = vpow.pop %v2151
    %v2153 = vmul.f32 %v2146, 1.442695
    %v2154 = vpow.pop %v2153
    %v2155 = vadd.f32 %v2148, 1.0
    %v2156 = vadd.f32 %v2150, 1.0
    %v2157 = vadd.f32 %v2152, 1.0
    %v2158 = vadd.f32 %v2154, 1.0
    %v2159 = vrcp.pop %v2155
    %v2160 = vmul.f32 %v2155, %v2159
    %v2161 = vsub.f32 1.0, %v2160
    %v2162 = vmul.f32 %v2159, %v2161
    %v2163 = vadd.f32 %v2159, %v2162
    %vm2164 = vweird.f32 %v2155
    %vm2165 = vweird.f32 %v2159
    %vm2166 = vmor %vm2164, %vm2165
    %v2167 = vsel %vm2166, %v2159, %v2163
    %v2168 = vand.u32 2147483647, %v2155
    %vm2169 = vcmp.eq.f32.partialorder %v2168, 8.507059e+37
    %v2170 = vand.u32 %v2155, 2147483648
    %v2171 = vor.u32 1.1754944e-38, %v2170
    %v2172 = vsel %vm2169, %v2171, %v2167
    %v2173 = vmul.f32 1.0, %v2172
    %v2174 = vrcp.pop %v2156
    %v2175 = vmul.f32 %v2156, %v2174
    %v2176 = vsub.f32 1.0, %v2175
    %v2177 = vmul.f32 %v2174, %v2176
    %v2178 = vadd.f32 %v2174, %v2177
    %vm2179 = vweird.f32 %v2156
    %vm2180 = vweird.f32 %v2174
    %vm2181 = vmor %vm2179, %vm2180
    %v2182 = vsel %vm2181, %v2174, %v2178
    %v2183 = vand.u32 2147483647, %v2156
    %vm2184 = vcmp.eq.f32.partialorder %v2183, 8.507059e+37
    %v2185 = vand.u32 %v2156, 2147483648
    %v2186 = vor.u32 1.1754944e-38, %v2185
    %v2187 = vsel %vm2184, %v2186, %v2182
    %v2188 = vmul.f32 1.0, %v2187
    %v2189 = vrcp.pop %v2157
    %v2190 = vmul.f32 %v2157, %v2189
    %v2191 = vsub.f32 1.0, %v2190
    %v2192 = vmul.f32 %v2189, %v2191
    %v2193 = vadd.f32 %v2189, %v2192
    %vm2194 = vweird.f32 %v2157
    %vm2195 = vweird.f32 %v2189
    %vm2196 = vmor %vm2194, %vm2195
    %v2197 = vsel %vm2196, %v2189, %v2193
    %v2198 = vand.u32 2147483647, %v2157
    %vm2199 = vcmp.eq.f32.partialorder %v2198, 8.507059e+37
    %v2200 = vand.u32 %v2157, 2147483648
    %v2201 = vor.u32 1.1754944e-38, %v2200
    %v2202 = vsel %vm2199, %v2201, %v2197
    %v2203 = vmul.f32 1.0, %v2202
    %v2204 = vrcp.pop %v2158
    %v2205 = vmul.f32 %v2158, %v2204
    %v2206 = vsub.f32 1.0, %v2205
    %v2207 = vmul.f32 %v2204, %v2206
    %v2208 = vadd.f32 %v2204, %v2207
    %vm2209 = vweird.f32 %v2158
    %vm2210 = vweird.f32 %v2204
    %vm2211 = vmor %vm2209, %vm2210
    %v2212 = vsel %vm2211, %v2204, %v2208
    %v2213 = vand.u32 2147483647, %v2158
    %vm2214 = vcmp.eq.f32.partialorder %v2213, 8.507059e+37
    %v2215 = vand.u32 %v2158, 2147483648
    %v2216 = vor.u32 1.1754944e-38, %v2215
    %v2217 = vsel %vm2214, %v2216, %v2212
    %v2218 = vmul.f32 1.0, %v2217
    %v2219 = vmul.f32 %v2097, %v2173
    %v2220 = vmul.f32 %v2111, %v2188
    %v2221 = vmul.f32 %v2099, %v2203
    %v2222 = vmul.f32 %v2113, %v2218
    %v2223 = vmul.f32 %v2219, %v2125
    %v2224 = vmul.f32 %v2220, %v2139
    %v2225 = vmul.f32 %v2221, %v2127
    %v2226 = vmul.f32 %v2222, %v2141
    %v2227 = vpack.c.bf16 %v2225, %v2223
    %v2228 = vpack.c.bf16 %v2226, %v2224
    %v2261 = vunpack.c.l.b16 %v1382
    %v2262 = vunpack.c.l.b16 %v1383
    %v2263 = vunpack.c.l.b16 %v1384
    %v2264 = vunpack.c.l.b16 %v1385
    %v2265 = vunpack.c.l.b16 %v1386
    %v2266 = vunpack.c.l.b16 %v1387
    %v2267 = vunpack.c.l.b16 %v1388
    %v2268 = vunpack.c.l.b16 %v1389
    %v2269 = vunpack.c.l.b16 %v1390
    %v2270 = vunpack.c.l.b16 %v1391
    %v2271 = vunpack.c.l.b16 %v1392
    %v2272 = vunpack.c.l.b16 %v1393
    %v2273 = vunpack.c.l.b16 %v1394
    %v2274 = vunpack.c.l.b16 %v1395
    %v2275 = vunpack.c.l.b16 %v1396
    %v2276 = vunpack.c.l.b16 %v1397
    %v2277 = vunpack.c.l.b16 %v1398
    %v2278 = vunpack.c.l.b16 %v1399
    %v2279 = vunpack.c.l.b16 %v1400
    %v2280 = vunpack.c.l.b16 %v1401
    %v2281 = vunpack.c.l.b16 %v1402
    %v2282 = vunpack.c.l.b16 %v1403
    %v2283 = vunpack.c.l.b16 %v1404
    %v2284 = vunpack.c.l.b16 %v1405
    %v2285 = vunpack.c.l.b16 %v1406
    %v2286 = vunpack.c.l.b16 %v1407
    %v2287 = vunpack.c.l.b16 %v1408
    %v2288 = vunpack.c.l.b16 %v1409
    %v2289 = vunpack.c.l.b16 %v1410
    %v2290 = vunpack.c.l.b16 %v1411
    %v2291 = vunpack.c.l.b16 %v1412
    %v2292 = vunpack.c.l.b16 %v1413
    %v2293 = vpack.c.b16 %v2262, %v2261
    %v2294 = vpack.c.b16 %v2264, %v2263
    %v2295 = vpack.c.b16 %v2266, %v2265
    %v2296 = vpack.c.b16 %v2268, %v2267
    %v2297 = vpack.c.b16 %v2270, %v2269
    %v2298 = vpack.c.b16 %v2272, %v2271
    %v2299 = vpack.c.b16 %v2274, %v2273
    %v2300 = vpack.c.b16 %v2276, %v2275
    %v2301 = vpack.c.b16 %v2278, %v2277
    %v2302 = vpack.c.b16 %v2280, %v2279
    %v2303 = vpack.c.b16 %v2282, %v2281
    %v2304 = vpack.c.b16 %v2284, %v2283
    %v2305 = vpack.c.b16 %v2286, %v2285
    %v2306 = vpack.c.b16 %v2288, %v2287
    %v2307 = vpack.c.b16 %v2290, %v2289
    %v2308 = vpack.c.b16 %v2292, %v2291
    %2325 = vmatpush.bf16.msra.mxu0 %v2300
    %2326 = vmatpush.bf16.msra.mxu0 %v2299
    %2327 = vmatpush.bf16.msra.mxu0 %v2298
    %2328 = vmatpush.bf16.msra.mxu0 %v2297
    %2329 = vmatpush.bf16.msra.mxu0 %v2296
    %2330 = vmatpush.bf16.msra.mxu0 %v2295
    %2331 = vmatpush.bf16.msra.mxu0 %v2294
    %2332 = vmatpush.bf16.msra.mxu0 %v2293
    %2333 = vmatmul.bf16.gmra.mxu0 %v2227
    %v2334 = vpop.f32.mrf.mxu0
    %v2335 = vadd.f32 0.0, %v2334
    %v2336 = vpop.f32.mrf.mxu0
    %v2337 = vadd.f32 0.0, %v2336
    %2338 = vdwg.mxu0
    %2339 = vmatpush.bf16.msra.mxu0 %v2308
    %2340 = vmatpush.bf16.msra.mxu0 %v2307
    %2341 = vmatpush.bf16.msra.mxu0 %v2306
    %2342 = vmatpush.bf16.msra.mxu0 %v2305
    %2343 = vmatpush.bf16.msra.mxu0 %v2304
    %2344 = vmatpush.bf16.msra.mxu0 %v2303
    %2345 = vmatpush.bf16.msra.mxu0 %v2302
    %2346 = vmatpush.bf16.msra.mxu0 %v2301
    %2347 = vmatmul.bf16.gmra.mxu0 %v2228
    %v2348 = vpop.f32.mrf.mxu0
    %v2349 = vadd.f32 %v2335, %v2348
    %v2350 = vpop.f32.mrf.mxu0
    %v2351 = vadd.f32 %v2337, %v2350
    %2352 = vdwg.mxu0
    %v2353 = vadd.f32 %v1884, %v2349
    %v2354 = vadd.f32 %v1885, %v2351
    %2355 = vadd.xlane.f32.xlu0 %v2353
    %v2356 = vpop.xlane.xlu0 %2355
    %2357 = vadd.xlane.f32.xlu0 %v2354
    %v2358 = vpop.xlane.xlu0 %2357
    %v2359 = vmul.f32 %v2356, %v351
    %v2360 = vmul.f32 %v2358, %v351
    %v2361 = vsub.f32 %v2353, %v2359
    %v2362 = vsub.f32 %v2354, %v2360
    %v2363 = vmul.f32 %v2361, %v2361
    %v2364 = vmul.f32 %v2362, %v2362
    %2365 = vadd.xlane.f32.xlu0 %v2363
    %v2366 = vpop.xlane.xlu0 %2365
    %2367 = vadd.xlane.f32.xlu0 %v2364
    %v2368 = vpop.xlane.xlu0 %2367
    %v2369 = vmul.f32 %v2366, %v351
    %v2370 = vmul.f32 %v2368, %v351
    %v2371 = vadd.f32 %v2369, 1e-06
    %v2372 = vadd.f32 %v2370, 1e-06
    %v2373 = vrsqrt.pop %v2371
    %v2374 = vmul.f32 %v2373, %v2371
    %v2375 = vmul.f32 %v2374, %v2373
    %v2376 = vmul.f32 0.5, %v2375
    %v2377 = vsub.f32 1.5, %v2376
    %v2378 = vmul.f32 %v2373, %v2377
    %vm2379 = vweird.f32 %v2371
    %vm2380 = vweird.f32 %v2373
    %vm2381 = vmor %vm2379, %vm2380
    %v2382 = vsel %vm2381, %v2373, %v2378
    %v2383 = vrsqrt.pop %v2372
    %v2384 = vmul.f32 %v2383, %v2372
    %v2385 = vmul.f32 %v2384, %v2383
    %v2386 = vmul.f32 0.5, %v2385
    %v2387 = vsub.f32 1.5, %v2386
    %v2388 = vmul.f32 %v2383, %v2387
    %vm2389 = vweird.f32 %v2372
    %vm2390 = vweird.f32 %v2383
    %vm2391 = vmor %vm2389, %vm2390
    %v2392 = vsel %vm2391, %v2383, %v2388
    %v2393 = vmul.f32 %v2361, %v2382
    %v2394 = vmul.f32 %v2362, %v2392
    %2395 = vst [vmem:[#allocation19] sm:$0xff] %v2393
    %2396 = vst [vmem:[#allocation19 + $0x8] sm:$0xff] %v2394
    // Predicated region
    $region82: #{tpu_custom_call.1} parent=1 // pred_check
      _
    $region83: #{tpu_custom_call.1} parent=1 // pred_check_branch
      %2398 = sbr.rel (0) target = $region85
    $region84: #{tpu_custom_call.1} parent=1 // pred_region
      %2400 = vsyncadd [#allocation4], 0
      %s2401 = sshll.u32 [#allocation19], 4
      %s2402 = int_to_ptr.vmem [resolvable:$true] %s2401
      %s2403 = sshll.u32 %s10, 4
      %s2404 = int_to_ptr.hbm [resolvable:$true] %s2403
      %2409 = dma.vmem_to_hbm [thread:$0]  %s2402, 256, %s2404, [#allocation4], 128, 128, 8
    $region85: #{tpu_custom_call.1} parent=1 // pred_fallthru
      _
    // Predicated region
    $region86: #{tpu_custom_call.1} parent=1 // pred_check
      _
    $region87: #{tpu_custom_call.1} parent=1 // pred_check_branch
      %2411 = sbr.rel (0) target = $region89
    $region88: #{tpu_custom_call.1} parent=1 // pred_region
      %2413 = dma.done [#allocation4], 256
    $region89: #{tpu_custom_call.1} parent=1 // pred_fallthru
      _
    %2414 = vsyncpa [#allocation3], 1
    %2415 = vsyncpa [#allocation6], 1
    %2416 = vsyncpa [#allocation9], 1
    %2417 = vsyncpa [#allocation12], 1
    %2418 = vsyncpa [#allocation15], 1
    %2419 = vsyncpa [#allocation18], 1
    %2420 = vsyncpa [#allocation4], 1

</llo_original>
